<compile_context>
chip_gen: v6e
topology: v6e:2x2x1
jax: 0.10.0
libtpu: 0.0.40
codegen_flags: <defaults>
</compile_context>

<pallas_src>
import functools
import math

import jax
import jax.numpy as jnp
from jax.experimental import pallas as pl
from jax.experimental.pallas import tpu as pltpu


# ----------------------------------------------------------------------------- kernel
def _gated_transition_kernel(z_ref, w1_ref, w2_ref, w3_ref, wz_ref, b_ref,
                             out_ref, *, z_dim, t_dim):
    Z, T = z_dim, t_dim
    mm_dtype = w1_ref.dtype                       # f32 or bf16 (big MXU slabs only)

    z_in = z_ref[...]
    z_mm = z_in.astype(mm_dtype)                  # operand for the big layer-1 matmul
    z_f32 = z_in.astype(jnp.float32)              # skip connection stays f32

    def mm(x, w, b_row):
        # MXU matmul with f32 accumulation, f32 bias add.
        return jnp.dot(x, w, preferred_element_type=jnp.float32) + b_row

    # packed bias slab (5, max(2T, 2Z)) f32; static slices are free.
    b1 = b_ref[0:1, : 2 * T]
    b2 = b_ref[1:2, : 2 * T]
    b3 = b_ref[2:3, : 2 * Z]
    bloc = b_ref[3:4, : Z]
    bsig = b_ref[4:5, : Z]

    # ---- layer 1: fused [gate | proposed_mean] z->hidden (2T lanes)
    h1 = jnp.maximum(mm(z_mm, w1_ref[...], b1), 0.0)                  # (tm, 2T)
    # ---- layer 2: block-diagonal hidden->hidden for both branches
    h2 = jnp.maximum(mm(h1.astype(mm_dtype), w2_ref[...], b2), 0.0)   # (tm, 2T)
    # ---- layer 3: block-diagonal hidden->z : [gate_preact | proposed_mean]
    x3 = mm(h2.astype(mm_dtype), w3_ref[...], b3)                     # (tm, 2Z)
    gate = jax.nn.sigmoid(x3[:, :Z])
    proposed_mean = x3[:, Z:]

    # ---- skip connection (f32) and outputs
    z_loc = mm(z_f32, wz_ref[:, :Z], bloc)                            # lin_z_to_loc(z)
    loc = (1.0 - gate) * z_loc + gate * proposed_mean
    scale = jax.nn.softplus(mm(jnp.maximum(proposed_mean, 0.0), wz_ref[:, Z:], bsig))

    # Lane-dense output block (width padded to a multiple of 128); direct stores
    # instead of materializing a concat. Padded batch rows carry bias-only
    # activations (finite) and are sliced off in the wrapper - intentional.
    out_ref[:, :Z] = loc.astype(out_ref.dtype)
    out_ref[:, Z:2 * Z] = scale.astype(out_ref.dtype)
    pad_w = out_ref.shape[1] - 2 * Z
    if pad_w:  # static
        out_ref[:, 2 * Z:] = jnp.zeros((out_ref.shape[0], pad_w), out_ref.dtype)


# ----------------------------------------------------------------------------- packing
def pack_params(params, compute_dtype=jnp.float32):
    """Pack the 8 Linear layers into 4 weight slabs + 1 bias slab.

    Weights stored (in_features, out_features); biases (1, out_features).
    `compute_dtype` applies to the three big MXU slabs only; the z_to_loc /
    sig slab and all biases stay f32 (skip-connection / scale precision).
    """
    wg1, bg1 = params["gate_z_to_hidden"]
    wg2, bg2 = params["gate_hidden_to_hidden"]
    wg3, bg3 = params["gate_hidden_to_z"]
    wp1, bp1 = params["pm_z_to_hidden"]
    wp2, bp2 = params["pm_hidden_to_hidden"]
    wp3, bp3 = params["pm_hidden_to_z"]
    wsig, bsig = params["sig"]
    wloc, bloc = params["z_to_loc"]

    Z, T = wg1.shape

    # layer-1 slab: z @ [Wg1 | Wp1]
    w1 = jnp.concatenate([wg1, wp1], axis=1)                          # (Z, 2T)
    # layer-2 / layer-3 block-diagonal slabs
    zTT = jnp.zeros((T, T), jnp.float32)
    w2 = jnp.block([[wg2, zTT], [zTT, wp2]])                          # (2T, 2T)
    zTZ = jnp.zeros((T, Z), jnp.float32)
    w3 = jnp.block([[wg3, zTZ], [zTZ, wp3]])                          # (2T, 2Z)
    # f32 slab: [Wloc | Wsig]
    wz = jnp.concatenate([wloc, wsig], axis=1)                        # (Z, 2Z)

    width = max(2 * T, 2 * Z)
    pad = lambda b: jnp.pad(b, ((0, 0), (0, width - b.shape[1])))
    b_slab = jnp.concatenate([
        pad(jnp.concatenate([bg1, bp1], axis=1)),
        pad(jnp.concatenate([bg2, bp2], axis=1)),
        pad(jnp.concatenate([bg3, bp3], axis=1)),
        pad(bloc),
        pad(bsig),
    ], axis=0)                                                        # (5, width)

    cast = lambda w: w.astype(compute_dtype)
    return (cast(w1), cast(w2), cast(w3),
            wz.astype(jnp.float32), b_slab.astype(jnp.float32))


# ----------------------------------------------------------------------------- wrapper
def _round_up(x, m):
    return ((x + m - 1) // m) * m


def _choose_tm(B):
    """Batch tile: large (amortize ~0.35us/step), 128-aligned for clean MXU row
    tiles, and >=2 grid steps for big batches so both v7x TensorCores engage."""
    B_aligned = _round_up(B, 128)
    if B_aligned <= 256:
        return B_aligned
    return min(1024, _round_up(B_aligned // 2, 128))


def gated_transition(z_t_1, packed, *, block_batch=None):
    """Returns (loc, scale) of p(z_t | z_{t-1}).

    `z_t_1` may have any leading dims (..., Z); they are flattened into one big
    batch (e.g. timesteps x batch) so a whole trajectory runs in one launch.
    `packed` comes from pack_params.
    """
    w1, w2, w3, wz, b_slab = packed
    Z = z_t_1.shape[-1]
    lead = z_t_1.shape[:-1]
    T = w2.shape[0] // 2

    z2d = z_t_1.reshape(-1, Z)
    B = z2d.shape[0]

    if block_batch is None:
        tm = _choose_tm(B)
    else:
        tm = _round_up(max(int(block_batch), 1), 128)   # keep MXU row tiles clean
    B_pad = _round_up(B, tm)
    if B_pad != B:
        z2d = jnp.pad(z2d, ((0, B_pad - B), (0, 0)))

    out_w = _round_up(2 * Z, 128)                        # lane-dense output block

    kernel = functools.partial(_gated_transition_kernel, z_dim=Z, t_dim=T)
    resident = lambda shape: pl.BlockSpec(shape, lambda i: (0, 0))

    out = pl.pallas_call(
        kernel,
        out_shape=jax.ShapeDtypeStruct((B_pad, out_w), jnp.float32),
        grid=(B_pad // tm,),
        in_specs=[
            pl.BlockSpec((tm, Z), lambda i: (i, 0)),     # streamed batch tile
            resident(w1.shape),
            resident(w2.shape),
            resident(w3.shape),
            resident(wz.shape),
            resident(b_slab.shape),
        ],
        out_specs=pl.BlockSpec((tm, out_w), lambda i: (i, 0)),
        compiler_params=pltpu.CompilerParams(dimension_semantics=("parallel",)),
    )(z2d, w1, w2, w3, wz, b_slab)

    loc = out[:B, :Z].reshape(*lead, Z)
    scale = out[:B, Z:2 * Z].reshape(*lead, Z)
    return loc, scale


# ----------------------------------------------------------------------------- init / reference
def init_params(key, z_dim, transition_dim):
    """Mimics torch.nn.Linear default init; lin_z_to_loc is identity / zero bias."""
    def linear_init(k, fan_in, fan_out):
        kw, kb = jax.random.split(k)
        bound = 1.0 / math.sqrt(fan_in)
        w = jax.random.uniform(kw, (fan_in, fan_out), jnp.float32, -bound, bound)
        b = jax.random.uniform(kb, (1, fan_out), jnp.float32, -bound, bound)
        return w, b

    keys = jax.random.split(key, 7)
    return {
        "gate_z_to_hidden": linear_init(keys[0], z_dim, transition_dim),
        "gate_hidden_to_hidden": linear_init(keys[1], transition_dim, transition_dim),
        "gate_hidden_to_z": linear_init(keys[2], transition_dim, z_dim),
        "pm_z_to_hidden": linear_init(keys[3], z_dim, transition_dim),
        "pm_hidden_to_hidden": linear_init(keys[4], transition_dim, transition_dim),
        "pm_hidden_to_z": linear_init(keys[5], transition_dim, z_dim),
        "sig": linear_init(keys[6], z_dim, z_dim),
        "z_to_loc": (jnp.eye(z_dim, dtype=jnp.float32),
                     jnp.zeros((1, z_dim), jnp.float32)),
    }


def _reference(z, params):
    """Pure-JAX reference matching the PyTorch forward."""
    def lin(x, name):
        w, b = params[name]
        return x @ w + b

    relu = jax.nn.relu
    _gate = relu(lin(z, "gate_z_to_hidden"))
    _gate = relu(lin(_gate, "gate_hidden_to_hidden"))
    gate = jax.nn.sigmoid(lin(_gate, "gate_hidden_to_z"))
    _pm = relu(lin(z, "pm_z_to_hidden"))
    _pm = relu(lin(_pm, "pm_hidden_to_hidden"))
    pm = lin(_pm, "pm_hidden_to_z")
    loc = (1 - gate) * lin(z, "z_to_loc") + gate * pm
    scale = jax.nn.softplus(lin(relu(pm), "sig"))
    return loc, scale


# ----------------------------------------------------------------------------- self-test
if __name__ == "__main__":
    Z_DIM, TRANSITION_DIM = 32, 64

    key = jax.random.PRNGKey(0)
    k_z, k_params, k_z2, k_z3 = jax.random.split(key, 4)
    params = init_params(k_params, Z_DIM, TRANSITION_DIM)
    packed_f32 = pack_params(params, jnp.float32)

    # ---- small batch, f32 MXU operands: strict check against reference
    z_small = jax.random.normal(k_z, (8, Z_DIM), dtype=jnp.float32)
    loc, scale = gated_transition(z_small, packed_f32)
    jax.block_until_ready((loc, scale))
    loc_ref, scale_ref = _reference(z_small, params)
    assert loc.shape == (8, Z_DIM) and scale.shape == (8, Z_DIM)
    assert jnp.allclose(loc, loc_ref, atol=1e-5, rtol=1e-5)
    assert jnp.allclose(scale, scale_ref, atol=1e-5, rtol=1e-5)

    # ---- larger non-multiple batch with an explicit tile: exercises the
    #      multi-step parallel grid, resident weights, batch padding
    z_big = jax.random.normal(k_z2, (200, Z_DIM), dtype=jnp.float32)
    loc_b, scale_b = gated_transition(z_big, packed_f32, block_batch=64)  # -> tm=128, 2 steps
    jax.block_until_ready((loc_b, scale_b))
    loc_br, scale_br = _reference(z_big, params)
    assert loc_b.shape == (200, Z_DIM) and scale_b.shape == (200, Z_DIM)
    assert jnp.allclose(loc_b, loc_br, atol=1e-5, rtol=1e-5)
    assert jnp.allclose(scale_b, scale_br, atol=1e-5, rtol=1e-5)

    # ---- trajectory (timesteps x batch) flattened into one launch
    z_seq = jax.random.normal(k_z3, (5, 40, Z_DIM), dtype=jnp.float32)
    loc_s, scale_s = gated_transition(z_seq, packed_f32)
    jax.block_until_ready((loc_s, scale_s))
    loc_sr, scale_sr = _reference(z_seq.reshape(-1, Z_DIM), params)
    assert loc_s.shape == (5, 40, Z_DIM) and scale_s.shape == (5, 40, Z_DIM)
    assert jnp.allclose(loc_s.reshape(-1, Z_DIM), loc_sr, atol=1e-5, rtol=1e-5)
    assert jnp.allclose(scale_s.reshape(-1, Z_DIM), scale_sr, atol=1e-5, rtol=1e-5)

    # ---- bf16 MXU slabs (f32 skip/sig path, f32 accumulation): loose tolerance
    packed_bf16 = pack_params(params, jnp.bfloat16)
    loc_h, scale_h = gated_transition(z_big, packed_bf16)
    jax.block_until_ready((loc_h, scale_h))
    assert jnp.allclose(loc_h, loc_br, atol=5e-2, rtol=5e-2)
    assert jnp.allclose(scale_h, scale_br, atol=5e-2, rtol=5e-2)

    print("KERNEL_OK")
</pallas_src>

<mosaic_0001>
module attributes {stable_mosaic.version = 11 : i64} {
  func.func @_gated_transition_kernel(%arg0: i32, %arg1: memref<128x32xf32, #tpu.memory_space<vmem>>, %arg2: memref<32x128xf32, #tpu.memory_space<vmem>>, %arg3: memref<128x128xf32, #tpu.memory_space<vmem>>, %arg4: memref<128x64xf32, #tpu.memory_space<vmem>>, %arg5: memref<32x64xf32, #tpu.memory_space<vmem>>, %arg6: memref<5x128xf32, #tpu.memory_space<vmem>>, %arg7: memref<128x128xf32, #tpu.memory_space<vmem>>) attributes {dimension_semantics = [#tpu.dimension_semantics<parallel>], iteration_bounds = array<i64: 1>, scalar_prefetch = 0 : i64, scratch_operands = 0 : i64, tpu.core_type = #tpu.core_type<tc>, window_params = [{transform_indices = @transform_0, window_bounds = array<i64: 128, 32>}, {pipeline_mode = #tpu.pipeline_mode<synchronous>, transform_indices = @transform_1, window_bounds = array<i64: 32, 128>}, {pipeline_mode = #tpu.pipeline_mode<synchronous>, transform_indices = @transform_2, window_bounds = array<i64: 128, 128>}, {pipeline_mode = #tpu.pipeline_mode<synchronous>, transform_indices = @transform_3, window_bounds = array<i64: 128, 64>}, {pipeline_mode = #tpu.pipeline_mode<synchronous>, transform_indices = @transform_4, window_bounds = array<i64: 32, 64>}, {pipeline_mode = #tpu.pipeline_mode<synchronous>, transform_indices = @transform_5, window_bounds = array<i64: 5, 128>}, {transform_indices = @transform_6, window_bounds = array<i64: 128, 128>}]} {
    %c0 = arith.constant 0 : index
    %c0_0 = arith.constant 0 : index
    %0 = vector.load %arg1[%c0, %c0_0] : memref<128x32xf32, #tpu.memory_space<vmem>>, vector<128x32xf32>
    %c0_1 = arith.constant 0 : index
    %c0_2 = arith.constant 0 : index
    %1 = vector.load %arg6[%c0_1, %c0_2] : memref<5x128xf32, #tpu.memory_space<vmem>>, vector<1x128xf32>
    %c1 = arith.constant 1 : index
    %c0_3 = arith.constant 0 : index
    %2 = vector.load %arg6[%c1, %c0_3] : memref<5x128xf32, #tpu.memory_space<vmem>>, vector<1x128xf32>
    %c2 = arith.constant 2 : index
    %c0_4 = arith.constant 0 : index
    %3 = vector.load %arg6[%c2, %c0_4] : memref<5x128xf32, #tpu.memory_space<vmem>>, vector<1x64xf32>
    %c3 = arith.constant 3 : index
    %c0_5 = arith.constant 0 : index
    %4 = vector.load %arg6[%c3, %c0_5] : memref<5x128xf32, #tpu.memory_space<vmem>>, vector<1x32xf32>
    %c4 = arith.constant 4 : index
    %c0_6 = arith.constant 0 : index
    %5 = vector.load %arg6[%c4, %c0_6] : memref<5x128xf32, #tpu.memory_space<vmem>>, vector<1x32xf32>
    %c0_7 = arith.constant 0 : index
    %c0_8 = arith.constant 0 : index
    %6 = vector.load %arg2[%c0_7, %c0_8] : memref<32x128xf32, #tpu.memory_space<vmem>>, vector<32x128xf32>
    %cst = arith.constant dense<0.000000e+00> : vector<128x128xf32>
    %7 = tpu.matmul %0, %6, %cst {dimension_numbers = #tpu.dot_dimension_numbers<[1], [0], [0], [1], [0, 0, 1, 1], [], []>} : vector<128x32xf32>, vector<32x128xf32>, vector<128x128xf32> -> vector<128x128xf32>
    %8 = vector.broadcast %1 : vector<1x128xf32> to vector<128x128xf32>
    %9 = arith.addf %7, %8 : vector<128x128xf32>
    %cst_9 = arith.constant 0.000000e+00 : f32
    %10 = vector.broadcast %cst_9 : f32 to vector<128x128xf32>
    %11 = arith.maximumf %9, %10 : vector<128x128xf32>
    %c0_10 = arith.constant 0 : index
    %c0_11 = arith.constant 0 : index
    %12 = vector.load %arg3[%c0_10, %c0_11] : memref<128x128xf32, #tpu.memory_space<vmem>>, vector<128x128xf32>
    %cst_12 = arith.constant dense<0.000000e+00> : vector<128x128xf32>
    %13 = tpu.matmul %11, %12, %cst_12 {dimension_numbers = #tpu.dot_dimension_numbers<[1], [0], [0], [1], [0, 0, 1, 1], [], []>} : vector<128x128xf32>, vector<128x128xf32>, vector<128x128xf32> -> vector<128x128xf32>
    %14 = vector.broadcast %2 : vector<1x128xf32> to vector<128x128xf32>
    %15 = arith.addf %13, %14 : vector<128x128xf32>
    %cst_13 = arith.constant 0.000000e+00 : f32
    %16 = vector.broadcast %cst_13 : f32 to vector<128x128xf32>
    %17 = arith.maximumf %15, %16 : vector<128x128xf32>
    %c0_14 = arith.constant 0 : index
    %c0_15 = arith.constant 0 : index
    %18 = vector.load %arg4[%c0_14, %c0_15] : memref<128x64xf32, #tpu.memory_space<vmem>>, vector<128x64xf32>
    %cst_16 = arith.constant dense<0.000000e+00> : vector<128x64xf32>
    %19 = tpu.matmul %17, %18, %cst_16 {dimension_numbers = #tpu.dot_dimension_numbers<[1], [0], [0], [1], [0, 0, 1, 1], [], []>} : vector<128x128xf32>, vector<128x64xf32>, vector<128x64xf32> -> vector<128x64xf32>
    %20 = vector.broadcast %3 : vector<1x64xf32> to vector<128x64xf32>
    %21 = arith.addf %19, %20 : vector<128x64xf32>
    %22 = vector.extract_strided_slice %21 {offsets = [0, 0], sizes = [128, 32], strides = [1, 1]} : vector<128x64xf32> to vector<128x32xf32>
    %23 = arith.negf %22 : vector<128x32xf32>
    %24 = math.exp %23 : vector<128x32xf32>
    %cst_17 = arith.constant 1.000000e+00 : f32
    %25 = vector.broadcast %cst_17 : f32 to vector<128x32xf32>
    %26 = arith.addf %25, %24 : vector<128x32xf32>
    %27 = arith.divf %25, %26 : vector<128x32xf32>
    %28 = vector.extract_strided_slice %21 {offsets = [0, 32], sizes = [128, 32], strides = [1, 1]} : vector<128x64xf32> to vector<128x32xf32>
    %c0_18 = arith.constant 0 : index
    %c0_19 = arith.constant 0 : index
    %29 = vector.load %arg5[%c0_18, %c0_19] : memref<32x64xf32, #tpu.memory_space<vmem>>, vector<32x32xf32>
    %cst_20 = arith.constant dense<0.000000e+00> : vector<128x32xf32>
    %30 = tpu.matmul %0, %29, %cst_20 {dimension_numbers = #tpu.dot_dimension_numbers<[1], [0], [0], [1], [0, 0, 1, 1], [], []>} : vector<128x32xf32>, vector<32x32xf32>, vector<128x32xf32> -> vector<128x32xf32>
    %31 = vector.broadcast %4 : vector<1x32xf32> to vector<128x32xf32>
    %32 = arith.addf %30, %31 : vector<128x32xf32>
    %cst_21 = arith.constant 1.000000e+00 : f32
    %33 = vector.broadcast %cst_21 : f32 to vector<128x32xf32>
    %34 = arith.subf %33, %27 : vector<128x32xf32>
    %35 = arith.mulf %34, %32 : vector<128x32xf32>
    %36 = arith.mulf %27, %28 : vector<128x32xf32>
    %37 = arith.addf %35, %36 : vector<128x32xf32>
    %cst_22 = arith.constant 0.000000e+00 : f32
    %38 = vector.broadcast %cst_22 : f32 to vector<128x32xf32>
    %39 = arith.maximumf %28, %38 : vector<128x32xf32>
    %c0_23 = arith.constant 0 : index
    %c32 = arith.constant 32 : index
    %40 = vector.load %arg5[%c0_23, %c32] : memref<32x64xf32, #tpu.memory_space<vmem>>, vector<32x32xf32>
    %cst_24 = arith.constant dense<0.000000e+00> : vector<128x32xf32>
    %41 = tpu.matmul %39, %40, %cst_24 {dimension_numbers = #tpu.dot_dimension_numbers<[1], [0], [0], [1], [0, 0, 1, 1], [], []>} : vector<128x32xf32>, vector<32x32xf32>, vector<128x32xf32> -> vector<128x32xf32>
    %42 = vector.broadcast %5 : vector<1x32xf32> to vector<128x32xf32>
    %43 = arith.addf %41, %42 : vector<128x32xf32>
    %cst_25 = arith.constant 0.000000e+00 : f32
    %44 = vector.broadcast %cst_25 : f32 to vector<128x32xf32>
    %45 = arith.maximumf %43, %44 : vector<128x32xf32>
    %46 = vector.broadcast %cst_25 : f32 to vector<128x32xf32>
    %47 = arith.subf %43, %46 : vector<128x32xf32>
    %48 = arith.cmpf one, %47, %47 : vector<128x32xf32>
    %49 = vector.broadcast %cst_25 : f32 to vector<128x32xf32>
    %50 = arith.addf %43, %49 : vector<128x32xf32>
    %51 = math.absf %47 : vector<128x32xf32>
    %cst_26 = arith.constant 0.000000e+00 : f32
    %52 = vector.broadcast %cst_26 : f32 to vector<128x32xf32>
    %53 = arith.subf %52, %51 : vector<128x32xf32>
    %54 = math.exp %53 : vector<128x32xf32>
    %55 = math.log1p %54 : vector<128x32xf32>
    %56 = arith.addf %45, %55 : vector<128x32xf32>
    %57 = arith.select %48, %50, %56 : vector<128x32xi1>, vector<128x32xf32>
    %c0_27 = arith.constant 0 : index
    %c0_28 = arith.constant 0 : index
    %58 = vector.load %arg7[%c0_27, %c0_28] : memref<128x128xf32, #tpu.memory_space<vmem>>, vector<128x32xf32>
    tpu.vector_store %arg7[%c0_27, %c0_28], %37 {strides = array<i32>} : memref<128x128xf32, #tpu.memory_space<vmem>>, vector<128x32xf32>,
    %c0_29 = arith.constant 0 : index
    %c32_30 = arith.constant 32 : index
    %59 = vector.load %arg7[%c0_29, %c32_30] : memref<128x128xf32, #tpu.memory_space<vmem>>, vector<128x32xf32>
    tpu.vector_store %arg7[%c0_29, %c32_30], %57 {strides = array<i32>} : memref<128x128xf32, #tpu.memory_space<vmem>>, vector<128x32xf32>,
    %cst_31 = arith.constant 0.000000e+00 : f32
    %60 = vector.broadcast %cst_31 : f32 to vector<128x64xf32>
    %c0_32 = arith.constant 0 : index
    %c64 = arith.constant 64 : index
    %61 = vector.load %arg7[%c0_32, %c64] : memref<128x128xf32, #tpu.memory_space<vmem>>, vector<128x64xf32>
    tpu.vector_store %arg7[%c0_32, %c64], %60 {strides = array<i32>} : memref<128x128xf32, #tpu.memory_space<vmem>>, vector<128x64xf32>,
    return
  }
  func.func @transform_0(%arg0: i32) -> (i32, i32) {
    %c0_i32 = arith.constant 0 : i32
    %c0_i32_0 = arith.constant 0 : i32
    return %arg0, %c0_i32 : i32, i32
  }
  func.func @transform_1(%arg0: i32) -> (i32, i32) {
    %c0_i32 = arith.constant 0 : i32
    %c0_i32_0 = arith.constant 0 : i32
    %c0_i32_1 = arith.constant 0 : i32
    return %c0_i32, %c0_i32_0 : i32, i32
  }
  func.func @transform_2(%arg0: i32) -> (i32, i32) {
    %c0_i32 = arith.constant 0 : i32
    %c0_i32_0 = arith.constant 0 : i32
    %c0_i32_1 = arith.constant 0 : i32
    return %c0_i32, %c0_i32_0 : i32, i32
  }
  func.func @transform_3(%arg0: i32) -> (i32, i32) {
    %c0_i32 = arith.constant 0 : i32
    %c0_i32_0 = arith.constant 0 : i32
    %c0_i32_1 = arith.constant 0 : i32
    return %c0_i32, %c0_i32_0 : i32, i32
  }
  func.func @transform_4(%arg0: i32) -> (i32, i32) {
    %c0_i32 = arith.constant 0 : i32
    %c0_i32_0 = arith.constant 0 : i32
    %c0_i32_1 = arith.constant 0 : i32
    return %c0_i32, %c0_i32_0 : i32, i32
  }
  func.func @transform_5(%arg0: i32) -> (i32, i32) {
    %c0_i32 = arith.constant 0 : i32
    %c0_i32_0 = arith.constant 0 : i32
    %c0_i32_1 = arith.constant 0 : i32
    return %c0_i32, %c0_i32_0 : i32, i32
  }
  func.func @transform_6(%arg0: i32) -> (i32, i32) {
    %c0_i32 = arith.constant 0 : i32
    %c0_i32_0 = arith.constant 0 : i32
    return %arg0, %c0_i32 : i32, i32
  }
}

</mosaic_0001>

<llo_original>
// kernel: tpu_custom_call.1
$region0: #{tpu_custom_call.1}
  #allocation0 [shape = 'u32[]', space=smem, size = 0x4, offset = 0x4, fixed_abs, tag = 'smem constant byte address 0x4 - core index']
  #allocation1 [shape = 'u32[144,128]{1,0:T(1,128)}', space=vmem, size = 0x12000, scoped, tag = 'internal scratch']
  %s0 = inlined_call_operand.vmem [shape: f32[128,32], index: 0, kind: input, shape index: {}]
  %s1 = inlined_call_operand.vmem [shape: f32[32,128], index: 1, kind: input, shape index: {}]
  %s2 = inlined_call_operand.vmem [shape: f32[128,128], index: 2, kind: input, shape index: {}]
  %s3 = inlined_call_operand.vmem [shape: f32[128,64], index: 3, kind: input, shape index: {}]
  %s4 = inlined_call_operand.vmem [shape: f32[32,64], index: 4, kind: input, shape index: {}]
  %s5 = inlined_call_operand.vmem [shape: f32[5,128], index: 5, kind: input, shape index: {}]
  %s6 = inlined_call_operand.hbm [shape: f32[128,128], index: 6, kind: output, shape index: {}]
  %s7 = sld [smem:[#allocation0]]
  $region34: #{tpu_custom_call.1} parent=0
    _
  %s9 = ssub.s32 1, %s7
  %s10 = scalar_select 0, %s9, %s7
  $region1: #{tpu_custom_call.1} parent=0
    #allocation2 [shape = 'u8[65536]{0}', space=vmem, size = 0x10000, scoped, tag = 'output window, operand 0, single buffered']
    #allocation3 [shape = 's32[1]{0}', space=sflag, size = 0x4, scoped, tag = 'scoped memory for tpu_custom_call.1']
    %11 = vsyncpa [#allocation3], 0
    // Predicated region
    $region2: #{tpu_custom_call.1} parent=1 // pred_check
      _
    $region3: #{tpu_custom_call.1} parent=1 // pred_check_branch
      %13 = sbr.rel (0) target = $region5
    $region4: #{tpu_custom_call.1} parent=1 // pred_region
      _
    $region5: #{tpu_custom_call.1} parent=1 // pred_fallthru
      _
    // Predicated region
    $region6: #{tpu_custom_call.1} parent=1 // pred_check
      _
    $region7: #{tpu_custom_call.1} parent=1 // pred_check_branch
      %15 = sbr.rel (0) target = $region9
    $region8: #{tpu_custom_call.1} parent=1 // pred_region
      _
    $region9: #{tpu_custom_call.1} parent=1 // pred_fallthru
      _
    // Predicated region
    $region10: #{tpu_custom_call.1} parent=1 // pred_check
      _
    $region11: #{tpu_custom_call.1} parent=1 // pred_check_branch
      %17 = sbr.rel (0) target = $region13
    $region12: #{tpu_custom_call.1} parent=1 // pred_region
      _
    $region13: #{tpu_custom_call.1} parent=1 // pred_fallthru
      _
    // Predicated region
    $region14: #{tpu_custom_call.1} parent=1 // pred_check
      _
    $region15: #{tpu_custom_call.1} parent=1 // pred_check_branch
      %19 = sbr.rel (0) target = $region17
    $region16: #{tpu_custom_call.1} parent=1 // pred_region
      _
    $region17: #{tpu_custom_call.1} parent=1 // pred_fallthru
      _
    // Predicated region
    $region18: #{tpu_custom_call.1} parent=1 // pred_check
      _
    $region19: #{tpu_custom_call.1} parent=1 // pred_check_branch
      %21 = sbr.rel (0) target = $region21
    $region20: #{tpu_custom_call.1} parent=1 // pred_region
      _
    $region21: #{tpu_custom_call.1} parent=1 // pred_fallthru
      _
    // Predicated region
    $region22: #{tpu_custom_call.1} parent=1 // pred_check
      _
    $region23: #{tpu_custom_call.1} parent=1 // pred_check_branch
      %23 = sbr.rel (0) target = $region25
    $region24: #{tpu_custom_call.1} parent=1 // pred_region
      _
    $region25: #{tpu_custom_call.1} parent=1 // pred_fallthru
      _
    %v24 = vld [vmem:[%s0] sm:$0xff]
    %v25 = vld [vmem:[%s0 + $0x8] sm:$0xff]
    %v26 = vld [vmem:[%s0 + $0x10] sm:$0xff]
    %v27 = vld [vmem:[%s0 + $0x18] sm:$0xff]
    %v28 = vld [vmem:[%s0 + $0x20] sm:$0xff]
    %v29 = vld [vmem:[%s0 + $0x28] sm:$0xff]
    %v30 = vld [vmem:[%s0 + $0x30] sm:$0xff]
    %v31 = vld [vmem:[%s0 + $0x38] sm:$0xff]
    %v32 = vld [vmem:[%s0 + $0x40] sm:$0xff]
    %v33 = vld [vmem:[%s0 + $0x48] sm:$0xff]
    %v34 = vld [vmem:[%s0 + $0x50] sm:$0xff]
    %v35 = vld [vmem:[%s0 + $0x58] sm:$0xff]
    %v36 = vld [vmem:[%s0 + $0x60] sm:$0xff]
    %v37 = vld [vmem:[%s0 + $0x68] sm:$0xff]
    %v38 = vld [vmem:[%s0 + $0x70] sm:$0xff]
    %v39 = vld [vmem:[%s0 + $0x78] sm:$0xff]
    %v40 = vld [vmem:[%s5] sm:$0x1]
    %v41 = vld [vmem:[%s5 + $0x1] sm:$0x1]
    %v42 = vld [vmem:[%s5 + $0x2] sm:$0x1]
    %v43 = vld [vmem:[%s5 + $0x3] sm:$0x1]
    %v44 = vld [vmem:[%s5 + $0x4] sm:$0x1]
    %v45 = vld [vmem:[%s1] sm:$0xff]
    %v46 = vld [vmem:[%s1 + $0x8] sm:$0xff]
    %v47 = vld [vmem:[%s1 + $0x10] sm:$0xff]
    %v48 = vld [vmem:[%s1 + $0x18] sm:$0xff]
    %v49 = vlaneseq
    %v50 = vshrl.u32 %v49, 7
    %v51 = vsub.s32 0, %v50
    %v52 = vrot.slane %v40, %v51
    %vm53 = vcmask 261120
    %v55 = vsel %vm53, %v24, 0
    %v58 = vsel %vm53, %v25, 0
    %v61 = vsel %vm53, %v26, 0
    %v64 = vsel %vm53, %v27, 0
    %v67 = vsel %vm53, %v28, 0
    %v70 = vsel %vm53, %v29, 0
    %v73 = vsel %vm53, %v30, 0
    %v76 = vsel %vm53, %v31, 0
    %v79 = vsel %vm53, %v32, 0
    %v82 = vsel %vm53, %v33, 0
    %v85 = vsel %vm53, %v34, 0
    %v88 = vsel %vm53, %v35, 0
    %v91 = vsel %vm53, %v36, 0
    %v94 = vsel %vm53, %v37, 0
    %v97 = vsel %vm53, %v38, 0
    %v100 = vsel %vm53, %v39, 0
    %102 = vmatprep.subr.mxu0 0.0
    %103 = vmatpush1.msra.mxu0 0.0
    %104 = vmatprep.subr.mxu0 0.0
    %105 = vmatpush1.msra.mxu0 0.0
    %106 = vmatprep.subr.mxu0 0.0
    %107 = vmatpush1.msra.mxu0 0.0
    %108 = vmatprep.subr.mxu0 0.0
    %109 = vmatpush1.msra.mxu0 0.0
    %110 = vmatprep.subr.mxu0 0.0
    %111 = vmatpush1.msra.mxu0 0.0
    %112 = vmatprep.subr.mxu0 0.0
    %113 = vmatpush1.msra.mxu0 0.0
    %114 = vmatprep.subr.mxu0 0.0
    %115 = vmatpush1.msra.mxu0 0.0
    %116 = vmatprep.subr.mxu0 0.0
    %117 = vmatpush1.msra.mxu0 0.0
    %118 = vmatprep.subr.mxu0 0.0
    %119 = vmatpush1.msra.mxu0 0.0
    %120 = vmatprep.subr.mxu0 0.0
    %121 = vmatpush1.msra.mxu0 0.0
    %122 = vmatprep.subr.mxu0 0.0
    %123 = vmatpush1.msra.mxu0 0.0
    %124 = vmatprep.subr.mxu0 0.0
    %125 = vmatpush1.msra.mxu0 0.0
    %126 = vmatprep.subr.mxu0 0.0
    %127 = vmatpush1.msra.mxu0 %v48
    %128 = vmatprep.subr.mxu0 0.0
    %129 = vmatpush1.msra.mxu0 %v47
    %130 = vmatprep.subr.mxu0 0.0
    %131 = vmatpush1.msra.mxu0 %v46
    %132 = vmatprep.subr.mxu0 0.0
    %133 = vmatpush1.msra.mxu0 %v45
    %134 = vmatprep.subr.mxu0 0.0
    %135 = vmatpush2.msra.mxu0 0.0
    %136 = vmatprep.subr.mxu0 0.0
    %137 = vmatpush2.msra.mxu0 0.0
    %138 = vmatprep.subr.mxu0 0.0
    %139 = vmatpush2.msra.mxu0 0.0
    %140 = vmatprep.subr.mxu0 0.0
    %141 = vmatpush2.msra.mxu0 0.0
    %142 = vmatprep.subr.mxu0 0.0
    %143 = vmatpush2.msra.mxu0 0.0
    %144 = vmatprep.subr.mxu0 0.0
    %145 = vmatpush2.msra.mxu0 0.0
    %146 = vmatprep.subr.mxu0 0.0
    %147 = vmatpush2.msra.mxu0 0.0
    %148 = vmatprep.subr.mxu0 0.0
    %149 = vmatpush2.msra.mxu0 0.0
    %150 = vmatprep.subr.mxu0 0.0
    %151 = vmatpush2.msra.mxu0 0.0
    %152 = vmatprep.subr.mxu0 0.0
    %153 = vmatpush2.msra.mxu0 0.0
    %154 = vmatprep.subr.mxu0 0.0
    %155 = vmatpush2.msra.mxu0 0.0
    %156 = vmatprep.subr.mxu0 0.0
    %157 = vmatpush2.msra.mxu0 0.0
    %158 = vmatprep.subr.mxu0 0.0
    %159 = vmatpush2.msra.mxu0 0.0
    %160 = vmatprep.subr.mxu0 0.0
    %161 = vmatpush2.msra.mxu0 0.0
    %162 = vmatprep.subr.mxu0 0.0
    %163 = vmatpush2.msra.mxu0 0.0
    %164 = vmatprep.subr.mxu0 0.0
    %165 = vmatpush2.msra.mxu0 0.0
    %166 = vmatprep.mubr.f32.mxu0 0.0
    %167 = vmatmul.mubr.f32.gmra.mxu0 %v55
    %v168 = vpop.f32.mrf.mxu0
    %v169 = vadd.f32 %v52, %v168
    %v170 = vpop.f32.mrf.mxu0
    %171 = vmatprep.mubr.f32.mxu0 0.0
    %172 = vmatmul.mubr.f32.gmra.mxu0 %v58
    %v173 = vpop.f32.mrf.mxu0
    %v174 = vadd.f32 %v52, %v173
    %v175 = vpop.f32.mrf.mxu0
    %176 = vmatprep.mubr.f32.mxu0 0.0
    %177 = vmatmul.mubr.f32.gmra.mxu0 %v61
    %v178 = vpop.f32.mrf.mxu0
    %v179 = vadd.f32 %v52, %v178
    %v180 = vpop.f32.mrf.mxu0
    %181 = vmatprep.mubr.f32.mxu0 0.0
    %182 = vmatmul.mubr.f32.gmra.mxu0 %v64
    %v183 = vpop.f32.mrf.mxu0
    %v184 = vadd.f32 %v52, %v183
    %v185 = vpop.f32.mrf.mxu0
    %186 = vmatprep.mubr.f32.mxu0 0.0
    %187 = vmatmul.mubr.f32.gmra.mxu0 %v67
    %v188 = vpop.f32.mrf.mxu0
    %v189 = vadd.f32 %v52, %v188
    %v190 = vpop.f32.mrf.mxu0
    %191 = vmatprep.mubr.f32.mxu0 0.0
    %192 = vmatmul.mubr.f32.gmra.mxu0 %v70
    %v193 = vpop.f32.mrf.mxu0
    %v194 = vadd.f32 %v52, %v193
    %v195 = vpop.f32.mrf.mxu0
    %196 = vmatprep.mubr.f32.mxu0 0.0
    %197 = vmatmul.mubr.f32.gmra.mxu0 %v73
    %v198 = vpop.f32.mrf.mxu0
    %v199 = vadd.f32 %v52, %v198
    %v200 = vpop.f32.mrf.mxu0
    %201 = vmatprep.mubr.f32.mxu0 0.0
    %202 = vmatmul.mubr.f32.gmra.mxu0 %v76
    %v203 = vpop.f32.mrf.mxu0
    %v204 = vadd.f32 %v52, %v203
    %v205 = vpop.f32.mrf.mxu0
    %206 = vmatprep.mubr.f32.mxu0 0.0
    %207 = vmatmul.mubr.f32.gmra.mxu0 %v79
    %v208 = vpop.f32.mrf.mxu0
    %v209 = vadd.f32 %v52, %v208
    %v210 = vpop.f32.mrf.mxu0
    %211 = vmatprep.mubr.f32.mxu0 0.0
    %212 = vmatmul.mubr.f32.gmra.mxu0 %v82
    %v213 = vpop.f32.mrf.mxu0
    %v214 = vadd.f32 %v52, %v213
    %v215 = vpop.f32.mrf.mxu0
    %216 = vmatprep.mubr.f32.mxu0 0.0
    %217 = vmatmul.mubr.f32.gmra.mxu0 %v85
    %v218 = vpop.f32.mrf.mxu0
    %v219 = vadd.f32 %v52, %v218
    %v220 = vpop.f32.mrf.mxu0
    %221 = vmatprep.mubr.f32.mxu0 0.0
    %222 = vmatmul.mubr.f32.gmra.mxu0 %v88
    %v223 = vpop.f32.mrf.mxu0
    %v224 = vadd.f32 %v52, %v223
    %v225 = vpop.f32.mrf.mxu0
    %226 = vmatprep.mubr.f32.mxu0 0.0
    %227 = vmatmul.mubr.f32.gmra.mxu0 %v91
    %v228 = vpop.f32.mrf.mxu0
    %v229 = vadd.f32 %v52, %v228
    %v230 = vpop.f32.mrf.mxu0
    %231 = vmatprep.mubr.f32.mxu0 0.0
    %232 = vmatmul.mubr.f32.gmra.mxu0 %v94
    %v233 = vpop.f32.mrf.mxu0
    %v234 = vadd.f32 %v52, %v233
    %v235 = vpop.f32.mrf.mxu0
    %236 = vmatprep.mubr.f32.mxu0 0.0
    %237 = vmatmul.mubr.f32.gmra.mxu0 %v97
    %v238 = vpop.f32.mrf.mxu0
    %v239 = vadd.f32 %v52, %v238
    %v240 = vpop.f32.mrf.mxu0
    %241 = vmatprep.mubr.f32.mxu0 0.0
    %242 = vmatmul.mubr.f32.gmra.mxu0 %v100
    %v243 = vpop.f32.mrf.mxu0
    %v244 = vadd.f32 %v52, %v243
    %v245 = vpop.f32.mrf.mxu0
    %246 = vdwg.mxu0
    %v247 = vmax.f32 %v169, 0.0
    %v248 = vmax.f32 %v174, 0.0
    %v249 = vmax.f32 %v179, 0.0
    %v250 = vmax.f32 %v184, 0.0
    %v251 = vmax.f32 %v189, 0.0
    %v252 = vmax.f32 %v194, 0.0
    %v253 = vmax.f32 %v199, 0.0
    %v254 = vmax.f32 %v204, 0.0
    %v255 = vmax.f32 %v209, 0.0
    %v256 = vmax.f32 %v214, 0.0
    %v257 = vmax.f32 %v219, 0.0
    %v258 = vmax.f32 %v224, 0.0
    %v259 = vmax.f32 %v229, 0.0
    %v260 = vmax.f32 %v234, 0.0
    %v261 = vmax.f32 %v239, 0.0
    %v262 = vmax.f32 %v244, 0.0
    %v263 = vld [vmem:[%s2] sm:$0xff]
    %v264 = vld [vmem:[%s2 + $0x8] sm:$0xff]
    %v265 = vld [vmem:[%s2 + $0x10] sm:$0xff]
    %v266 = vld [vmem:[%s2 + $0x18] sm:$0xff]
    %v267 = vld [vmem:[%s2 + $0x20] sm:$0xff]
    %v268 = vld [vmem:[%s2 + $0x28] sm:$0xff]
    %v269 = vld [vmem:[%s2 + $0x30] sm:$0xff]
    %v270 = vld [vmem:[%s2 + $0x38] sm:$0xff]
    %v271 = vld [vmem:[%s2 + $0x40] sm:$0xff]
    %v272 = vld [vmem:[%s2 + $0x48] sm:$0xff]
    %v273 = vld [vmem:[%s2 + $0x50] sm:$0xff]
    %v274 = vld [vmem:[%s2 + $0x58] sm:$0xff]
    %v275 = vld [vmem:[%s2 + $0x60] sm:$0xff]
    %v276 = vld [vmem:[%s2 + $0x68] sm:$0xff]
    %v277 = vld [vmem:[%s2 + $0x70] sm:$0xff]
    %v278 = vld [vmem:[%s2 + $0x78] sm:$0xff]
    %v279 = vlaneseq
    %v280 = vshrl.u32 %v279, 7
    %v281 = vsub.s32 0, %v280
    %v282 = vrot.slane %v41, %v281
    %283 = vmatprep.subr.mxu0 0.0
    %284 = vmatpush1.msra.mxu0 %v278
    %285 = vmatprep.subr.mxu0 0.0
    %286 = vmatpush1.msra.mxu0 %v277
    %287 = vmatprep.subr.mxu0 0.0
    %288 = vmatpush1.msra.mxu0 %v276
    %289 = vmatprep.subr.mxu0 0.0
    %290 = vmatpush1.msra.mxu0 %v275
    %291 = vmatprep.subr.mxu0 0.0
    %292 = vmatpush1.msra.mxu0 %v274
    %293 = vmatprep.subr.mxu0 0.0
    %294 = vmatpush1.msra.mxu0 %v273
    %295 = vmatprep.subr.mxu0 0.0
    %296 = vmatpush1.msra.mxu0 %v272
    %297 = vmatprep.subr.mxu0 0.0
    %298 = vmatpush1.msra.mxu0 %v271
    %299 = vmatprep.subr.mxu0 0.0
    %300 = vmatpush1.msra.mxu0 %v270
    %301 = vmatprep.subr.mxu0 0.0
    %302 = vmatpush1.msra.mxu0 %v269
    %303 = vmatprep.subr.mxu0 0.0
    %304 = vmatpush1.msra.mxu0 %v268
    %305 = vmatprep.subr.mxu0 0.0
    %306 = vmatpush1.msra.mxu0 %v267
    %307 = vmatprep.subr.mxu0 0.0
    %308 = vmatpush1.msra.mxu0 %v266
    %309 = vmatprep.subr.mxu0 0.0
    %310 = vmatpush1.msra.mxu0 %v265
    %311 = vmatprep.subr.mxu0 0.0
    %312 = vmatpush1.msra.mxu0 %v264
    %313 = vmatprep.subr.mxu0 0.0
    %314 = vmatpush1.msra.mxu0 %v263
    %315 = vmatprep.subr.mxu0 0.0
    %316 = vmatpush2.msra.mxu0 0.0
    %317 = vmatprep.subr.mxu0 0.0
    %318 = vmatpush2.msra.mxu0 0.0
    %319 = vmatprep.subr.mxu0 0.0
    %320 = vmatpush2.msra.mxu0 0.0
    %321 = vmatprep.subr.mxu0 0.0
    %322 = vmatpush2.msra.mxu0 0.0
    %323 = vmatprep.subr.mxu0 0.0
    %324 = vmatpush2.msra.mxu0 0.0
    %325 = vmatprep.subr.mxu0 0.0
    %326 = vmatpush2.msra.mxu0 0.0
    %327 = vmatprep.subr.mxu0 0.0
    %328 = vmatpush2.msra.mxu0 0.0
    %329 = vmatprep.subr.mxu0 0.0
    %330 = vmatpush2.msra.mxu0 0.0
    %331 = vmatprep.subr.mxu0 0.0
    %332 = vmatpush2.msra.mxu0 0.0
    %333 = vmatprep.subr.mxu0 0.0
    %334 = vmatpush2.msra.mxu0 0.0
    %335 = vmatprep.subr.mxu0 0.0
    %336 = vmatpush2.msra.mxu0 0.0
    %337 = vmatprep.subr.mxu0 0.0
    %338 = vmatpush2.msra.mxu0 0.0
    %339 = vmatprep.subr.mxu0 0.0
    %340 = vmatpush2.msra.mxu0 0.0
    %341 = vmatprep.subr.mxu0 0.0
    %342 = vmatpush2.msra.mxu0 0.0
    %343 = vmatprep.subr.mxu0 0.0
    %344 = vmatpush2.msra.mxu0 0.0
    %345 = vmatprep.subr.mxu0 0.0
    %346 = vmatpush2.msra.mxu0 0.0
    %347 = vmatprep.mubr.f32.mxu0 0.0
    %348 = vmatmul.mubr.f32.gmra.mxu0 %v247
    %v349 = vpop.f32.mrf.mxu0
    %v350 = vadd.f32 %v282, %v349
    %v351 = vpop.f32.mrf.mxu0
    %352 = vmatprep.mubr.f32.mxu0 0.0
    %353 = vmatmul.mubr.f32.gmra.mxu0 %v248
    %v354 = vpop.f32.mrf.mxu0
    %v355 = vadd.f32 %v282, %v354
    %v356 = vpop.f32.mrf.mxu0
    %357 = vmatprep.mubr.f32.mxu0 0.0
    %358 = vmatmul.mubr.f32.gmra.mxu0 %v249
    %v359 = vpop.f32.mrf.mxu0
    %v360 = vadd.f32 %v282, %v359
    %v361 = vpop.f32.mrf.mxu0
    %362 = vmatprep.mubr.f32.mxu0 0.0
    %363 = vmatmul.mubr.f32.gmra.mxu0 %v250
    %v364 = vpop.f32.mrf.mxu0
    %v365 = vadd.f32 %v282, %v364
    %v366 = vpop.f32.mrf.mxu0
    %367 = vmatprep.mubr.f32.mxu0 0.0
    %368 = vmatmul.mubr.f32.gmra.mxu0 %v251
    %v369 = vpop.f32.mrf.mxu0
    %v370 = vadd.f32 %v282, %v369
    %v371 = vpop.f32.mrf.mxu0
    %372 = vmatprep.mubr.f32.mxu0 0.0
    %373 = vmatmul.mubr.f32.gmra.mxu0 %v252
    %v374 = vpop.f32.mrf.mxu0
    %v375 = vadd.f32 %v282, %v374
    %v376 = vpop.f32.mrf.mxu0
    %377 = vmatprep.mubr.f32.mxu0 0.0
    %378 = vmatmul.mubr.f32.gmra.mxu0 %v253
    %v379 = vpop.f32.mrf.mxu0
    %v380 = vadd.f32 %v282, %v379
    %v381 = vpop.f32.mrf.mxu0
    %382 = vmatprep.mubr.f32.mxu0 0.0
    %383 = vmatmul.mubr.f32.gmra.mxu0 %v254
    %v384 = vpop.f32.mrf.mxu0
    %v385 = vadd.f32 %v282, %v384
    %v386 = vpop.f32.mrf.mxu0
    %387 = vmatprep.mubr.f32.mxu0 0.0
    %388 = vmatmul.mubr.f32.gmra.mxu0 %v255
    %v389 = vpop.f32.mrf.mxu0
    %v390 = vadd.f32 %v282, %v389
    %v391 = vpop.f32.mrf.mxu0
    %392 = vmatprep.mubr.f32.mxu0 0.0
    %393 = vmatmul.mubr.f32.gmra.mxu0 %v256
    %v394 = vpop.f32.mrf.mxu0
    %v395 = vadd.f32 %v282, %v394
    %v396 = vpop.f32.mrf.mxu0
    %397 = vmatprep.mubr.f32.mxu0 0.0
    %398 = vmatmul.mubr.f32.gmra.mxu0 %v257
    %v399 = vpop.f32.mrf.mxu0
    %v400 = vadd.f32 %v282, %v399
    %v401 = vpop.f32.mrf.mxu0
    %402 = vmatprep.mubr.f32.mxu0 0.0
    %403 = vmatmul.mubr.f32.gmra.mxu0 %v258
    %v404 = vpop.f32.mrf.mxu0
    %v405 = vadd.f32 %v282, %v404
    %v406 = vpop.f32.mrf.mxu0
    %407 = vmatprep.mubr.f32.mxu0 0.0
    %408 = vmatmul.mubr.f32.gmra.mxu0 %v259
    %v409 = vpop.f32.mrf.mxu0
    %v410 = vadd.f32 %v282, %v409
    %v411 = vpop.f32.mrf.mxu0
    %412 = vmatprep.mubr.f32.mxu0 0.0
    %413 = vmatmul.mubr.f32.gmra.mxu0 %v260
    %v414 = vpop.f32.mrf.mxu0
    %v415 = vadd.f32 %v282, %v414
    %v416 = vpop.f32.mrf.mxu0
    %417 = vmatprep.mubr.f32.mxu0 0.0
    %418 = vmatmul.mubr.f32.gmra.mxu0 %v261
    %v419 = vpop.f32.mrf.mxu0
    %v420 = vadd.f32 %v282, %v419
    %v421 = vpop.f32.mrf.mxu0
    %422 = vmatprep.mubr.f32.mxu0 0.0
    %423 = vmatmul.mubr.f32.gmra.mxu0 %v262
    %v424 = vpop.f32.mrf.mxu0
    %v425 = vadd.f32 %v282, %v424
    %v426 = vpop.f32.mrf.mxu0
    %427 = vdwg.mxu0
    %v428 = vmax.f32 %v350, 0.0
    %v429 = vmax.f32 %v355, 0.0
    %v430 = vmax.f32 %v360, 0.0
    %v431 = vmax.f32 %v365, 0.0
    %v432 = vmax.f32 %v370, 0.0
    %v433 = vmax.f32 %v375, 0.0
    %v434 = vmax.f32 %v380, 0.0
    %v435 = vmax.f32 %v385, 0.0
    %v436 = vmax.f32 %v390, 0.0
    %v437 = vmax.f32 %v395, 0.0
    %v438 = vmax.f32 %v400, 0.0
    %v439 = vmax.f32 %v405, 0.0
    %v440 = vmax.f32 %v410, 0.0
    %v441 = vmax.f32 %v415, 0.0
    %v442 = vmax.f32 %v420, 0.0
    %v443 = vmax.f32 %v425, 0.0
    %v444 = vld [vmem:[%s3] sm:$0xff]
    %v445 = vld [vmem:[%s3 + $0x8] sm:$0xff]
    %v446 = vld [vmem:[%s3 + $0x10] sm:$0xff]
    %v447 = vld [vmem:[%s3 + $0x18] sm:$0xff]
    %v448 = vld [vmem:[%s3 + $0x20] sm:$0xff]
    %v449 = vld [vmem:[%s3 + $0x28] sm:$0xff]
    %v450 = vld [vmem:[%s3 + $0x30] sm:$0xff]
    %v451 = vld [vmem:[%s3 + $0x38] sm:$0xff]
    %v452 = vld [vmem:[%s3 + $0x40] sm:$0xff]
    %v453 = vld [vmem:[%s3 + $0x48] sm:$0xff]
    %v454 = vld [vmem:[%s3 + $0x50] sm:$0xff]
    %v455 = vld [vmem:[%s3 + $0x58] sm:$0xff]
    %v456 = vld [vmem:[%s3 + $0x60] sm:$0xff]
    %v457 = vld [vmem:[%s3 + $0x68] sm:$0xff]
    %v458 = vld [vmem:[%s3 + $0x70] sm:$0xff]
    %v459 = vld [vmem:[%s3 + $0x78] sm:$0xff]
    %v460 = vlaneseq
    %v461 = vshrl.u32 %v460, 7
    %v462 = vsub.s32 0, %v461
    %v463 = vrot.slane %v42, %v462
    %464 = vmatprep.subr.mxu0 0.0
    %465 = vmatpush1.msra.mxu0 %v459
    %466 = vmatprep.subr.mxu0 0.0
    %467 = vmatpush1.msra.mxu0 %v458
    %468 = vmatprep.subr.mxu0 0.0
    %469 = vmatpush1.msra.mxu0 %v457
    %470 = vmatprep.subr.mxu0 0.0
    %471 = vmatpush1.msra.mxu0 %v456
    %472 = vmatprep.subr.mxu0 0.0
    %473 = vmatpush1.msra.mxu0 %v455
    %474 = vmatprep.subr.mxu0 0.0
    %475 = vmatpush1.msra.mxu0 %v454
    %476 = vmatprep.subr.mxu0 0.0
    %477 = vmatpush1.msra.mxu0 %v453
    %478 = vmatprep.subr.mxu0 0.0
    %479 = vmatpush1.msra.mxu0 %v452
    %480 = vmatprep.subr.mxu0 0.0
    %481 = vmatpush1.msra.mxu0 %v451
    %482 = vmatprep.subr.mxu0 0.0
    %483 = vmatpush1.msra.mxu0 %v450
    %484 = vmatprep.subr.mxu0 0.0
    %485 = vmatpush1.msra.mxu0 %v449
    %486 = vmatprep.subr.mxu0 0.0
    %487 = vmatpush1.msra.mxu0 %v448
    %488 = vmatprep.subr.mxu0 0.0
    %489 = vmatpush1.msra.mxu0 %v447
    %490 = vmatprep.subr.mxu0 0.0
    %491 = vmatpush1.msra.mxu0 %v446
    %492 = vmatprep.subr.mxu0 0.0
    %493 = vmatpush1.msra.mxu0 %v445
    %494 = vmatprep.subr.mxu0 0.0
    %495 = vmatpush1.msra.mxu0 %v444
    %496 = vmatprep.subr.mxu0 0.0
    %497 = vmatpush2.msra.mxu0 0.0
    %498 = vmatprep.subr.mxu0 0.0
    %499 = vmatpush2.msra.mxu0 0.0
    %500 = vmatprep.subr.mxu0 0.0
    %501 = vmatpush2.msra.mxu0 0.0
    %502 = vmatprep.subr.mxu0 0.0
    %503 = vmatpush2.msra.mxu0 0.0
    %504 = vmatprep.subr.mxu0 0.0
    %505 = vmatpush2.msra.mxu0 0.0
    %506 = vmatprep.subr.mxu0 0.0
    %507 = vmatpush2.msra.mxu0 0.0
    %508 = vmatprep.subr.mxu0 0.0
    %509 = vmatpush2.msra.mxu0 0.0
    %510 = vmatprep.subr.mxu0 0.0
    %511 = vmatpush2.msra.mxu0 0.0
    %512 = vmatprep.subr.mxu0 0.0
    %513 = vmatpush2.msra.mxu0 0.0
    %514 = vmatprep.subr.mxu0 0.0
    %515 = vmatpush2.msra.mxu0 0.0
    %516 = vmatprep.subr.mxu0 0.0
    %517 = vmatpush2.msra.mxu0 0.0
    %518 = vmatprep.subr.mxu0 0.0
    %519 = vmatpush2.msra.mxu0 0.0
    %520 = vmatprep.subr.mxu0 0.0
    %521 = vmatpush2.msra.mxu0 0.0
    %522 = vmatprep.subr.mxu0 0.0
    %523 = vmatpush2.msra.mxu0 0.0
    %524 = vmatprep.subr.mxu0 0.0
    %525 = vmatpush2.msra.mxu0 0.0
    %526 = vmatprep.subr.mxu0 0.0
    %527 = vmatpush2.msra.mxu0 0.0
    %528 = vmatprep.mubr.f32.mxu0 0.0
    %529 = vmatmul.mubr.f32.gmra.mxu0 %v428
    %v530 = vpop.f32.mrf.mxu0
    %v531 = vadd.f32 %v463, %v530
    %v532 = vpop.f32.mrf.mxu0
    %533 = vmatprep.mubr.f32.mxu0 0.0
    %534 = vmatmul.mubr.f32.gmra.mxu0 %v429
    %v535 = vpop.f32.mrf.mxu0
    %v536 = vadd.f32 %v463, %v535
    %v537 = vpop.f32.mrf.mxu0
    %538 = vmatprep.mubr.f32.mxu0 0.0
    %539 = vmatmul.mubr.f32.gmra.mxu0 %v430
    %v540 = vpop.f32.mrf.mxu0
    %v541 = vadd.f32 %v463, %v540
    %v542 = vpop.f32.mrf.mxu0
    %543 = vmatprep.mubr.f32.mxu0 0.0
    %544 = vmatmul.mubr.f32.gmra.mxu0 %v431
    %v545 = vpop.f32.mrf.mxu0
    %v546 = vadd.f32 %v463, %v545
    %v547 = vpop.f32.mrf.mxu0
    %548 = vmatprep.mubr.f32.mxu0 0.0
    %549 = vmatmul.mubr.f32.gmra.mxu0 %v432
    %v550 = vpop.f32.mrf.mxu0
    %v551 = vadd.f32 %v463, %v550
    %v552 = vpop.f32.mrf.mxu0
    %553 = vmatprep.mubr.f32.mxu0 0.0
    %554 = vmatmul.mubr.f32.gmra.mxu0 %v433
    %v555 = vpop.f32.mrf.mxu0
    %v556 = vadd.f32 %v463, %v555
    %v557 = vpop.f32.mrf.mxu0
    %558 = vmatprep.mubr.f32.mxu0 0.0
    %559 = vmatmul.mubr.f32.gmra.mxu0 %v434
    %v560 = vpop.f32.mrf.mxu0
    %v561 = vadd.f32 %v463, %v560
    %v562 = vpop.f32.mrf.mxu0
    %563 = vmatprep.mubr.f32.mxu0 0.0
    %564 = vmatmul.mubr.f32.gmra.mxu0 %v435
    %v565 = vpop.f32.mrf.mxu0
    %v566 = vadd.f32 %v463, %v565
    %v567 = vpop.f32.mrf.mxu0
    %568 = vmatprep.mubr.f32.mxu0 0.0
    %569 = vmatmul.mubr.f32.gmra.mxu0 %v436
    %v570 = vpop.f32.mrf.mxu0
    %v571 = vadd.f32 %v463, %v570
    %v572 = vpop.f32.mrf.mxu0
    %573 = vmatprep.mubr.f32.mxu0 0.0
    %574 = vmatmul.mubr.f32.gmra.mxu0 %v437
    %v575 = vpop.f32.mrf.mxu0
    %v576 = vadd.f32 %v463, %v575
    %v577 = vpop.f32.mrf.mxu0
    %578 = vmatprep.mubr.f32.mxu0 0.0
    %579 = vmatmul.mubr.f32.gmra.mxu0 %v438
    %v580 = vpop.f32.mrf.mxu0
    %v581 = vadd.f32 %v463, %v580
    %v582 = vpop.f32.mrf.mxu0
    %583 = vmatprep.mubr.f32.mxu0 0.0
    %584 = vmatmul.mubr.f32.gmra.mxu0 %v439
    %v585 = vpop.f32.mrf.mxu0
    %v586 = vadd.f32 %v463, %v585
    %v587 = vpop.f32.mrf.mxu0
    %588 = vmatprep.mubr.f32.mxu0 0.0
    %589 = vmatmul.mubr.f32.gmra.mxu0 %v440
    %v590 = vpop.f32.mrf.mxu0
    %v591 = vadd.f32 %v463, %v590
    %v592 = vpop.f32.mrf.mxu0
    %593 = vmatprep.mubr.f32.mxu0 0.0
    %594 = vmatmul.mubr.f32.gmra.mxu0 %v441
    %v595 = vpop.f32.mrf.mxu0
    %v596 = vadd.f32 %v463, %v595
    %v597 = vpop.f32.mrf.mxu0
    %598 = vmatprep.mubr.f32.mxu0 0.0
    %599 = vmatmul.mubr.f32.gmra.mxu0 %v442
    %v600 = vpop.f32.mrf.mxu0
    %v601 = vadd.f32 %v463, %v600
    %v602 = vpop.f32.mrf.mxu0
    %603 = vmatprep.mubr.f32.mxu0 0.0
    %604 = vmatmul.mubr.f32.gmra.mxu0 %v443
    %v605 = vpop.f32.mrf.mxu0
    %v606 = vadd.f32 %v463, %v605
    %v607 = vpop.f32.mrf.mxu0
    %608 = vdwg.mxu0
    %v609 = vxor.u32 %v531, 2147483648
    %v610 = vxor.u32 %v536, 2147483648
    %v611 = vxor.u32 %v541, 2147483648
    %v612 = vxor.u32 %v546, 2147483648
    %v613 = vxor.u32 %v551, 2147483648
    %v614 = vxor.u32 %v556, 2147483648
    %v615 = vxor.u32 %v561, 2147483648
    %v616 = vxor.u32 %v566, 2147483648
    %v617 = vxor.u32 %v571, 2147483648
    %v618 = vxor.u32 %v576, 2147483648
    %v619 = vxor.u32 %v581, 2147483648
    %v620 = vxor.u32 %v586, 2147483648
    %v621 = vxor.u32 %v591, 2147483648
    %v622 = vxor.u32 %v596, 2147483648
    %v623 = vxor.u32 %v601, 2147483648
    %v624 = vxor.u32 %v606, 2147483648
    %v625 = vmul.f32 %v609, 1.442695
    %v626 = vpow.pop %v625
    %v627 = vmul.f32 %v610, 1.442695
    %v628 = vpow.pop %v627
    %v629 = vmul.f32 %v611, 1.442695
    %v630 = vpow.pop %v629
    %v631 = vmul.f32 %v612, 1.442695
    %v632 = vpow.pop %v631
    %v633 = vmul.f32 %v613, 1.442695
    %v634 = vpow.pop %v633
    %v635 = vmul.f32 %v614, 1.442695
    %v636 = vpow.pop %v635
    %v637 = vmul.f32 %v615, 1.442695
    %v638 = vpow.pop %v637
    %v639 = vmul.f32 %v616, 1.442695
    %v640 = vpow.pop %v639
    %v641 = vmul.f32 %v617, 1.442695
    %v642 = vpow.pop %v641
    %v643 = vmul.f32 %v618, 1.442695
    %v644 = vpow.pop %v643
    %v645 = vmul.f32 %v619, 1.442695
    %v646 = vpow.pop %v645
    %v647 = vmul.f32 %v620, 1.442695
    %v648 = vpow.pop %v647
    %v649 = vmul.f32 %v621, 1.442695
    %v650 = vpow.pop %v649
    %v651 = vmul.f32 %v622, 1.442695
    %v652 = vpow.pop %v651
    %v653 = vmul.f32 %v623, 1.442695
    %v654 = vpow.pop %v653
    %v655 = vmul.f32 %v624, 1.442695
    %v656 = vpow.pop %v655
    %v657 = vadd.f32 %v626, 1.0
    %v658 = vadd.f32 %v628, 1.0
    %v659 = vadd.f32 %v630, 1.0
    %v660 = vadd.f32 %v632, 1.0
    %v661 = vadd.f32 %v634, 1.0
    %v662 = vadd.f32 %v636, 1.0
    %v663 = vadd.f32 %v638, 1.0
    %v664 = vadd.f32 %v640, 1.0
    %v665 = vadd.f32 %v642, 1.0
    %v666 = vadd.f32 %v644, 1.0
    %v667 = vadd.f32 %v646, 1.0
    %v668 = vadd.f32 %v648, 1.0
    %v669 = vadd.f32 %v650, 1.0
    %v670 = vadd.f32 %v652, 1.0
    %v671 = vadd.f32 %v654, 1.0
    %v672 = vadd.f32 %v656, 1.0
    %v673 = vrcp.pop %v657
    %v674 = vmul.f32 1.0, %v673
    %v675 = vrcp.pop %v658
    %v676 = vmul.f32 1.0, %v675
    %v677 = vrcp.pop %v659
    %v678 = vmul.f32 1.0, %v677
    %v679 = vrcp.pop %v660
    %v680 = vmul.f32 1.0, %v679
    %v681 = vrcp.pop %v661
    %v682 = vmul.f32 1.0, %v681
    %v683 = vrcp.pop %v662
    %v684 = vmul.f32 1.0, %v683
    %v685 = vrcp.pop %v663
    %v686 = vmul.f32 1.0, %v685
    %v687 = vrcp.pop %v664
    %v688 = vmul.f32 1.0, %v687
    %v689 = vrcp.pop %v665
    %v690 = vmul.f32 1.0, %v689
    %v691 = vrcp.pop %v666
    %v692 = vmul.f32 1.0, %v691
    %v693 = vrcp.pop %v667
    %v694 = vmul.f32 1.0, %v693
    %v695 = vrcp.pop %v668
    %v696 = vmul.f32 1.0, %v695
    %v697 = vrcp.pop %v669
    %v698 = vmul.f32 1.0, %v697
    %v699 = vrcp.pop %v670
    %v700 = vmul.f32 1.0, %v699
    %v701 = vrcp.pop %v671
    %v702 = vmul.f32 1.0, %v701
    %v703 = vrcp.pop %v672
    %v704 = vmul.f32 1.0, %v703
    %v705 = vld [vmem:[%s4] sm:$0xff]
    %v706 = vld [vmem:[%s4 + $0x8] sm:$0xff]
    %v707 = vld [vmem:[%s4 + $0x10] sm:$0xff]
    %v708 = vld [vmem:[%s4 + $0x18] sm:$0xff]
    %v709 = vlaneseq
    %v710 = vshrl.u32 %v709, 7
    %v711 = vsub.s32 0, %v710
    %v712 = vrot.slane %v43, %v711
    %713 = vmatprep.subr.mxu0 0.0
    %714 = vmatpush1.msra.mxu0 0.0
    %715 = vmatprep.subr.mxu0 0.0
    %716 = vmatpush1.msra.mxu0 0.0
    %717 = vmatprep.subr.mxu0 0.0
    %718 = vmatpush1.msra.mxu0 0.0
    %719 = vmatprep.subr.mxu0 0.0
    %720 = vmatpush1.msra.mxu0 0.0
    %721 = vmatprep.subr.mxu0 0.0
    %722 = vmatpush1.msra.mxu0 0.0
    %723 = vmatprep.subr.mxu0 0.0
    %724 = vmatpush1.msra.mxu0 0.0
    %725 = vmatprep.subr.mxu0 0.0
    %726 = vmatpush1.msra.mxu0 0.0
    %727 = vmatprep.subr.mxu0 0.0
    %728 = vmatpush1.msra.mxu0 0.0
    %729 = vmatprep.subr.mxu0 0.0
    %730 = vmatpush1.msra.mxu0 0.0
    %731 = vmatprep.subr.mxu0 0.0
    %732 = vmatpush1.msra.mxu0 0.0
    %733 = vmatprep.subr.mxu0 0.0
    %734 = vmatpush1.msra.mxu0 0.0
    %735 = vmatprep.subr.mxu0 0.0
    %736 = vmatpush1.msra.mxu0 0.0
    %737 = vmatprep.subr.mxu0 0.0
    %738 = vmatpush1.msra.mxu0 %v708
    %739 = vmatprep.subr.mxu0 0.0
    %740 = vmatpush1.msra.mxu0 %v707
    %741 = vmatprep.subr.mxu0 0.0
    %742 = vmatpush1.msra.mxu0 %v706
    %743 = vmatprep.subr.mxu0 0.0
    %744 = vmatpush1.msra.mxu0 %v705
    %745 = vmatprep.subr.mxu0 0.0
    %746 = vmatpush2.msra.mxu0 0.0
    %747 = vmatprep.subr.mxu0 0.0
    %748 = vmatpush2.msra.mxu0 0.0
    %749 = vmatprep.subr.mxu0 0.0
    %750 = vmatpush2.msra.mxu0 0.0
    %751 = vmatprep.subr.mxu0 0.0
    %752 = vmatpush2.msra.mxu0 0.0
    %753 = vmatprep.subr.mxu0 0.0
    %754 = vmatpush2.msra.mxu0 0.0
    %755 = vmatprep.subr.mxu0 0.0
    %756 = vmatpush2.msra.mxu0 0.0
    %757 = vmatprep.subr.mxu0 0.0
    %758 = vmatpush2.msra.mxu0 0.0
    %759 = vmatprep.subr.mxu0 0.0
    %760 = vmatpush2.msra.mxu0 0.0
    %761 = vmatprep.subr.mxu0 0.0
    %762 = vmatpush2.msra.mxu0 0.0
    %763 = vmatprep.subr.mxu0 0.0
    %764 = vmatpush2.msra.mxu0 0.0
    %765 = vmatprep.subr.mxu0 0.0
    %766 = vmatpush2.msra.mxu0 0.0
    %767 = vmatprep.subr.mxu0 0.0
    %768 = vmatpush2.msra.mxu0 0.0
    %769 = vmatprep.subr.mxu0 0.0
    %770 = vmatpush2.msra.mxu0 0.0
    %771 = vmatprep.subr.mxu0 0.0
    %772 = vmatpush2.msra.mxu0 0.0
    %773 = vmatprep.subr.mxu0 0.0
    %774 = vmatpush2.msra.mxu0 0.0
    %775 = vmatprep.subr.mxu0 0.0
    %776 = vmatpush2.msra.mxu0 0.0
    %777 = vmatprep.mubr.f32.mxu0 0.0
    %778 = vmatmul.mubr.f32.gmra.mxu0 %v55
    %v779 = vpop.f32.mrf.mxu0
    %v780 = vadd.f32 %v712, %v779
    %v781 = vpop.f32.mrf.mxu0
    %782 = vmatprep.mubr.f32.mxu0 0.0
    %783 = vmatmul.mubr.f32.gmra.mxu0 %v58
    %v784 = vpop.f32.mrf.mxu0
    %v785 = vadd.f32 %v712, %v784
    %v786 = vpop.f32.mrf.mxu0
    %787 = vmatprep.mubr.f32.mxu0 0.0
    %788 = vmatmul.mubr.f32.gmra.mxu0 %v61
    %v789 = vpop.f32.mrf.mxu0
    %v790 = vadd.f32 %v712, %v789
    %v791 = vpop.f32.mrf.mxu0
    %792 = vmatprep.mubr.f32.mxu0 0.0
    %793 = vmatmul.mubr.f32.gmra.mxu0 %v64
    %v794 = vpop.f32.mrf.mxu0
    %v795 = vadd.f32 %v712, %v794
    %v796 = vpop.f32.mrf.mxu0
    %797 = vmatprep.mubr.f32.mxu0 0.0
    %798 = vmatmul.mubr.f32.gmra.mxu0 %v67
    %v799 = vpop.f32.mrf.mxu0
    %v800 = vadd.f32 %v712, %v799
    %v801 = vpop.f32.mrf.mxu0
    %802 = vmatprep.mubr.f32.mxu0 0.0
    %803 = vmatmul.mubr.f32.gmra.mxu0 %v70
    %v804 = vpop.f32.mrf.mxu0
    %v805 = vadd.f32 %v712, %v804
    %v806 = vpop.f32.mrf.mxu0
    %807 = vmatprep.mubr.f32.mxu0 0.0
    %808 = vmatmul.mubr.f32.gmra.mxu0 %v73
    %v809 = vpop.f32.mrf.mxu0
    %v810 = vadd.f32 %v712, %v809
    %v811 = vpop.f32.mrf.mxu0
    %812 = vmatprep.mubr.f32.mxu0 0.0
    %813 = vmatmul.mubr.f32.gmra.mxu0 %v76
    %v814 = vpop.f32.mrf.mxu0
    %v815 = vadd.f32 %v712, %v814
    %v816 = vpop.f32.mrf.mxu0
    %817 = vmatprep.mubr.f32.mxu0 0.0
    %818 = vmatmul.mubr.f32.gmra.mxu0 %v79
    %v819 = vpop.f32.mrf.mxu0
    %v820 = vadd.f32 %v712, %v819
    %v821 = vpop.f32.mrf.mxu0
    %822 = vmatprep.mubr.f32.mxu0 0.0
    %823 = vmatmul.mubr.f32.gmra.mxu0 %v82
    %v824 = vpop.f32.mrf.mxu0
    %v825 = vadd.f32 %v712, %v824
    %v826 = vpop.f32.mrf.mxu0
    %827 = vmatprep.mubr.f32.mxu0 0.0
    %828 = vmatmul.mubr.f32.gmra.mxu0 %v85
    %v829 = vpop.f32.mrf.mxu0
    %v830 = vadd.f32 %v712, %v829
    %v831 = vpop.f32.mrf.mxu0
    %832 = vmatprep.mubr.f32.mxu0 0.0
    %833 = vmatmul.mubr.f32.gmra.mxu0 %v88
    %v834 = vpop.f32.mrf.mxu0
    %v835 = vadd.f32 %v712, %v834
    %v836 = vpop.f32.mrf.mxu0
    %837 = vmatprep.mubr.f32.mxu0 0.0
    %838 = vmatmul.mubr.f32.gmra.mxu0 %v91
    %v839 = vpop.f32.mrf.mxu0
    %v840 = vadd.f32 %v712, %v839
    %v841 = vpop.f32.mrf.mxu0
    %842 = vmatprep.mubr.f32.mxu0 0.0
    %843 = vmatmul.mubr.f32.gmra.mxu0 %v94
    %v844 = vpop.f32.mrf.mxu0
    %v845 = vadd.f32 %v712, %v844
    %v846 = vpop.f32.mrf.mxu0
    %847 = vmatprep.mubr.f32.mxu0 0.0
    %848 = vmatmul.mubr.f32.gmra.mxu0 %v97
    %v849 = vpop.f32.mrf.mxu0
    %v850 = vadd.f32 %v712, %v849
    %v851 = vpop.f32.mrf.mxu0
    %852 = vmatprep.mubr.f32.mxu0 0.0
    %853 = vmatmul.mubr.f32.gmra.mxu0 %v100
    %v854 = vpop.f32.mrf.mxu0
    %v855 = vadd.f32 %v712, %v854
    %v856 = vpop.f32.mrf.mxu0
    %857 = vdwg.mxu0
    %v858 = vsub.f32 1.0, %v674
    %v859 = vsub.f32 1.0, %v676
    %v860 = vsub.f32 1.0, %v678
    %v861 = vsub.f32 1.0, %v680
    %v862 = vsub.f32 1.0, %v682
    %v863 = vsub.f32 1.0, %v684
    %v864 = vsub.f32 1.0, %v686
    %v865 = vsub.f32 1.0, %v688
    %v866 = vsub.f32 1.0, %v690
    %v867 = vsub.f32 1.0, %v692
    %v868 = vsub.f32 1.0, %v694
    %v869 = vsub.f32 1.0, %v696
    %v870 = vsub.f32 1.0, %v698
    %v871 = vsub.f32 1.0, %v700
    %v872 = vsub.f32 1.0, %v702
    %v873 = vsub.f32 1.0, %v704
    %v874 = vmul.f32 %v858, %v780
    %v875 = vmul.f32 %v859, %v785
    %v876 = vmul.f32 %v860, %v790
    %v877 = vmul.f32 %v861, %v795
    %v878 = vmul.f32 %v862, %v800
    %v879 = vmul.f32 %v863, %v805
    %v880 = vmul.f32 %v864, %v810
    %v881 = vmul.f32 %v865, %v815
    %v882 = vmul.f32 %v866, %v820
    %v883 = vmul.f32 %v867, %v825
    %v884 = vmul.f32 %v868, %v830
    %v885 = vmul.f32 %v869, %v835
    %v886 = vmul.f32 %v870, %v840
    %v887 = vmul.f32 %v871, %v845
    %v888 = vmul.f32 %v872, %v850
    %v889 = vmul.f32 %v873, %v855
    %906 = vrot.lane.b32.xlu0 %v531, 96
    %v907 = vpop.permute.xlu0 %906
    %908 = vrot.lane.b32.xlu0 %v536, 96
    %v909 = vpop.permute.xlu0 %908
    %910 = vrot.lane.b32.xlu0 %v541, 96
    %v911 = vpop.permute.xlu0 %910
    %912 = vrot.lane.b32.xlu0 %v546, 96
    %v913 = vpop.permute.xlu0 %912
    %914 = vrot.lane.b32.xlu0 %v551, 96
    %v915 = vpop.permute.xlu0 %914
    %916 = vrot.lane.b32.xlu0 %v556, 96
    %v917 = vpop.permute.xlu0 %916
    %918 = vrot.lane.b32.xlu0 %v561, 96
    %v919 = vpop.permute.xlu0 %918
    %920 = vrot.lane.b32.xlu0 %v566, 96
    %v921 = vpop.permute.xlu0 %920
    %922 = vrot.lane.b32.xlu0 %v571, 96
    %v923 = vpop.permute.xlu0 %922
    %924 = vrot.lane.b32.xlu0 %v576, 96
    %v925 = vpop.permute.xlu0 %924
    %926 = vrot.lane.b32.xlu0 %v581, 96
    %v927 = vpop.permute.xlu0 %926
    %928 = vrot.lane.b32.xlu0 %v586, 96
    %v929 = vpop.permute.xlu0 %928
    %930 = vrot.lane.b32.xlu0 %v591, 96
    %v931 = vpop.permute.xlu0 %930
    %932 = vrot.lane.b32.xlu0 %v596, 96
    %v933 = vpop.permute.xlu0 %932
    %934 = vrot.lane.b32.xlu0 %v601, 96
    %v935 = vpop.permute.xlu0 %934
    %936 = vrot.lane.b32.xlu0 %v606, 96
    %v937 = vpop.permute.xlu0 %936
    %v954 = vmul.f32 %v674, %v907
    %v955 = vmul.f32 %v676, %v909
    %v956 = vmul.f32 %v678, %v911
    %v957 = vmul.f32 %v680, %v913
    %v958 = vmul.f32 %v682, %v915
    %v959 = vmul.f32 %v684, %v917
    %v960 = vmul.f32 %v686, %v919
    %v961 = vmul.f32 %v688, %v921
    %v962 = vmul.f32 %v690, %v923
    %v963 = vmul.f32 %v692, %v925
    %v964 = vmul.f32 %v694, %v927
    %v965 = vmul.f32 %v696, %v929
    %v966 = vmul.f32 %v698, %v931
    %v967 = vmul.f32 %v700, %v933
    %v968 = vmul.f32 %v702, %v935
    %v969 = vmul.f32 %v704, %v937
    %v970 = vadd.f32 %v874, %v954
    %v971 = vadd.f32 %v875, %v955
    %v972 = vadd.f32 %v876, %v956
    %v973 = vadd.f32 %v877, %v957
    %v974 = vadd.f32 %v878, %v958
    %v975 = vadd.f32 %v879, %v959
    %v976 = vadd.f32 %v880, %v960
    %v977 = vadd.f32 %v881, %v961
    %v978 = vadd.f32 %v882, %v962
    %v979 = vadd.f32 %v883, %v963
    %v980 = vadd.f32 %v884, %v964
    %v981 = vadd.f32 %v885, %v965
    %v982 = vadd.f32 %v886, %v966
    %v983 = vadd.f32 %v887, %v967
    %v984 = vadd.f32 %v888, %v968
    %v985 = vadd.f32 %v889, %v969
    %v986 = vmax.f32 %v531, 0.0
    %v987 = vmax.f32 %v536, 0.0
    %v988 = vmax.f32 %v541, 0.0
    %v989 = vmax.f32 %v546, 0.0
    %v990 = vmax.f32 %v551, 0.0
    %v991 = vmax.f32 %v556, 0.0
    %v992 = vmax.f32 %v561, 0.0
    %v993 = vmax.f32 %v566, 0.0
    %v994 = vmax.f32 %v571, 0.0
    %v995 = vmax.f32 %v576, 0.0
    %v996 = vmax.f32 %v581, 0.0
    %v997 = vmax.f32 %v586, 0.0
    %v998 = vmax.f32 %v591, 0.0
    %v999 = vmax.f32 %v596, 0.0
    %v1000 = vmax.f32 %v601, 0.0
    %v1001 = vmax.f32 %v606, 0.0
    %v1002 = vlaneseq
    %v1003 = vshrl.u32 %v1002, 7
    %v1004 = vsub.s32 0, %v1003
    %v1005 = vrot.slane %v44, %v1004
    %1022 = vrot.lane.b32.xlu0 %v986, 96
    %v1023 = vpop.permute.xlu0 %1022
    %1024 = vrot.lane.b32.xlu0 %v987, 96
    %v1025 = vpop.permute.xlu0 %1024
    %1026 = vrot.lane.b32.xlu0 %v988, 96
    %v1027 = vpop.permute.xlu0 %1026
    %1028 = vrot.lane.b32.xlu0 %v989, 96
    %v1029 = vpop.permute.xlu0 %1028
    %1030 = vrot.lane.b32.xlu0 %v990, 96
    %v1031 = vpop.permute.xlu0 %1030
    %1032 = vrot.lane.b32.xlu0 %v991, 96
    %v1033 = vpop.permute.xlu0 %1032
    %1034 = vrot.lane.b32.xlu0 %v992, 96
    %v1035 = vpop.permute.xlu0 %1034
    %1036 = vrot.lane.b32.xlu0 %v993, 96
    %v1037 = vpop.permute.xlu0 %1036
    %1038 = vrot.lane.b32.xlu0 %v994, 96
    %v1039 = vpop.permute.xlu0 %1038
    %1040 = vrot.lane.b32.xlu0 %v995, 96
    %v1041 = vpop.permute.xlu0 %1040
    %1042 = vrot.lane.b32.xlu0 %v996, 96
    %v1043 = vpop.permute.xlu0 %1042
    %1044 = vrot.lane.b32.xlu0 %v997, 96
    %v1045 = vpop.permute.xlu0 %1044
    %1046 = vrot.lane.b32.xlu0 %v998, 96
    %v1047 = vpop.permute.xlu0 %1046
    %1048 = vrot.lane.b32.xlu0 %v999, 96
    %v1049 = vpop.permute.xlu0 %1048
    %1050 = vrot.lane.b32.xlu0 %v1000, 96
    %v1051 = vpop.permute.xlu0 %1050
    %1052 = vrot.lane.b32.xlu0 %v1001, 96
    %v1053 = vpop.permute.xlu0 %1052
    %1058 = vrot.lane.b32.xlu0 %v705, 96
    %v1059 = vpop.permute.xlu0 %1058
    %1060 = vrot.lane.b32.xlu0 %v706, 96
    %v1061 = vpop.permute.xlu0 %1060
    %1062 = vrot.lane.b32.xlu0 %v707, 96
    %v1063 = vpop.permute.xlu0 %1062
    %1064 = vrot.lane.b32.xlu0 %v708, 96
    %v1065 = vpop.permute.xlu0 %1064
    %v1070 = vsel %vm53, %v1023, 0
    %v1072 = vsel %vm53, %v1025, 0
    %v1074 = vsel %vm53, %v1027, 0
    %v1076 = vsel %vm53, %v1029, 0
    %v1078 = vsel %vm53, %v1031, 0
    %v1080 = vsel %vm53, %v1033, 0
    %v1082 = vsel %vm53, %v1035, 0
    %v1084 = vsel %vm53, %v1037, 0
    %v1086 = vsel %vm53, %v1039, 0
    %v1088 = vsel %vm53, %v1041, 0
    %v1090 = vsel %vm53, %v1043, 0
    %v1092 = vsel %vm53, %v1045, 0
    %v1094 = vsel %vm53, %v1047, 0
    %v1096 = vsel %vm53, %v1049, 0
    %v1098 = vsel %vm53, %v1051, 0
    %v1100 = vsel %vm53, %v1053, 0
    %1102 = vmatprep.subr.mxu0 0.0
    %1103 = vmatpush1.msra.mxu0 0.0
    %1104 = vmatprep.subr.mxu0 0.0
    %1105 = vmatpush1.msra.mxu0 0.0
    %1106 = vmatprep.subr.mxu0 0.0
    %1107 = vmatpush1.msra.mxu0 0.0
    %1108 = vmatprep.subr.mxu0 0.0
    %1109 = vmatpush1.msra.mxu0 0.0
    %1110 = vmatprep.subr.mxu0 0.0
    %1111 = vmatpush1.msra.mxu0 0.0
    %1112 = vmatprep.subr.mxu0 0.0
    %1113 = vmatpush1.msra.mxu0 0.0
    %1114 = vmatprep.subr.mxu0 0.0
    %1115 = vmatpush1.msra.mxu0 0.0
    %1116 = vmatprep.subr.mxu0 0.0
    %1117 = vmatpush1.msra.mxu0 0.0
    %1118 = vmatprep.subr.mxu0 0.0
    %1119 = vmatpush1.msra.mxu0 0.0
    %1120 = vmatprep.subr.mxu0 0.0
    %1121 = vmatpush1.msra.mxu0 0.0
    %1122 = vmatprep.subr.mxu0 0.0
    %1123 = vmatpush1.msra.mxu0 0.0
    %1124 = vmatprep.subr.mxu0 0.0
    %1125 = vmatpush1.msra.mxu0 0.0
    %1126 = vmatprep.subr.mxu0 0.0
    %1127 = vmatpush1.msra.mxu0 %v1065
    %1128 = vmatprep.subr.mxu0 0.0
    %1129 = vmatpush1.msra.mxu0 %v1063
    %1130 = vmatprep.subr.mxu0 0.0
    %1131 = vmatpush1.msra.mxu0 %v1061
    %1132 = vmatprep.subr.mxu0 0.0
    %1133 = vmatpush1.msra.mxu0 %v1059
    %1134 = vmatprep.subr.mxu0 0.0
    %1135 = vmatpush2.msra.mxu0 0.0
    %1136 = vmatprep.subr.mxu0 0.0
    %1137 = vmatpush2.msra.mxu0 0.0
    %1138 = vmatprep.subr.mxu0 0.0
    %1139 = vmatpush2.msra.mxu0 0.0
    %1140 = vmatprep.subr.mxu0 0.0
    %1141 = vmatpush2.msra.mxu0 0.0
    %1142 = vmatprep.subr.mxu0 0.0
    %1143 = vmatpush2.msra.mxu0 0.0
    %1144 = vmatprep.subr.mxu0 0.0
    %1145 = vmatpush2.msra.mxu0 0.0
    %1146 = vmatprep.subr.mxu0 0.0
    %1147 = vmatpush2.msra.mxu0 0.0
    %1148 = vmatprep.subr.mxu0 0.0
    %1149 = vmatpush2.msra.mxu0 0.0
    %1150 = vmatprep.subr.mxu0 0.0
    %1151 = vmatpush2.msra.mxu0 0.0
    %1152 = vmatprep.subr.mxu0 0.0
    %1153 = vmatpush2.msra.mxu0 0.0
    %1154 = vmatprep.subr.mxu0 0.0
    %1155 = vmatpush2.msra.mxu0 0.0
    %1156 = vmatprep.subr.mxu0 0.0
    %1157 = vmatpush2.msra.mxu0 0.0
    %1158 = vmatprep.subr.mxu0 0.0
    %1159 = vmatpush2.msra.mxu0 0.0
    %1160 = vmatprep.subr.mxu0 0.0
    %1161 = vmatpush2.msra.mxu0 0.0
    %1162 = vmatprep.subr.mxu0 0.0
    %1163 = vmatpush2.msra.mxu0 0.0
    %1164 = vmatprep.subr.mxu0 0.0
    %1165 = vmatpush2.msra.mxu0 0.0
    %1166 = vmatprep.mubr.f32.mxu0 0.0
    %1167 = vmatmul.mubr.f32.gmra.mxu0 %v1070
    %v1168 = vpop.f32.mrf.mxu0
    %v1169 = vadd.f32 %v1005, %v1168
    %v1170 = vpop.f32.mrf.mxu0
    %1171 = vmatprep.mubr.f32.mxu0 0.0
    %1172 = vmatmul.mubr.f32.gmra.mxu0 %v1072
    %v1173 = vpop.f32.mrf.mxu0
    %v1174 = vadd.f32 %v1005, %v1173
    %v1175 = vpop.f32.mrf.mxu0
    %1176 = vmatprep.mubr.f32.mxu0 0.0
    %1177 = vmatmul.mubr.f32.gmra.mxu0 %v1074
    %v1178 = vpop.f32.mrf.mxu0
    %v1179 = vadd.f32 %v1005, %v1178
    %v1180 = vpop.f32.mrf.mxu0
    %1181 = vmatprep.mubr.f32.mxu0 0.0
    %1182 = vmatmul.mubr.f32.gmra.mxu0 %v1076
    %v1183 = vpop.f32.mrf.mxu0
    %v1184 = vadd.f32 %v1005, %v1183
    %v1185 = vpop.f32.mrf.mxu0
    %1186 = vmatprep.mubr.f32.mxu0 0.0
    %1187 = vmatmul.mubr.f32.gmra.mxu0 %v1078
    %v1188 = vpop.f32.mrf.mxu0
    %v1189 = vadd.f32 %v1005, %v1188
    %v1190 = vpop.f32.mrf.mxu0
    %1191 = vmatprep.mubr.f32.mxu0 0.0
    %1192 = vmatmul.mubr.f32.gmra.mxu0 %v1080
    %v1193 = vpop.f32.mrf.mxu0
    %v1194 = vadd.f32 %v1005, %v1193
    %v1195 = vpop.f32.mrf.mxu0
    %1196 = vmatprep.mubr.f32.mxu0 0.0
    %1197 = vmatmul.mubr.f32.gmra.mxu0 %v1082
    %v1198 = vpop.f32.mrf.mxu0
    %v1199 = vadd.f32 %v1005, %v1198
    %v1200 = vpop.f32.mrf.mxu0
    %1201 = vmatprep.mubr.f32.mxu0 0.0
    %1202 = vmatmul.mubr.f32.gmra.mxu0 %v1084
    %v1203 = vpop.f32.mrf.mxu0
    %v1204 = vadd.f32 %v1005, %v1203
    %v1205 = vpop.f32.mrf.mxu0
    %1206 = vmatprep.mubr.f32.mxu0 0.0
    %1207 = vmatmul.mubr.f32.gmra.mxu0 %v1086
    %v1208 = vpop.f32.mrf.mxu0
    %v1209 = vadd.f32 %v1005, %v1208
    %v1210 = vpop.f32.mrf.mxu0
    %1211 = vmatprep.mubr.f32.mxu0 0.0
    %1212 = vmatmul.mubr.f32.gmra.mxu0 %v1088
    %v1213 = vpop.f32.mrf.mxu0
    %v1214 = vadd.f32 %v1005, %v1213
    %v1215 = vpop.f32.mrf.mxu0
    %1216 = vmatprep.mubr.f32.mxu0 0.0
    %1217 = vmatmul.mubr.f32.gmra.mxu0 %v1090
    %v1218 = vpop.f32.mrf.mxu0
    %v1219 = vadd.f32 %v1005, %v1218
    %v1220 = vpop.f32.mrf.mxu0
    %1221 = vmatprep.mubr.f32.mxu0 0.0
    %1222 = vmatmul.mubr.f32.gmra.mxu0 %v1092
    %v1223 = vpop.f32.mrf.mxu0
    %v1224 = vadd.f32 %v1005, %v1223
    %v1225 = vpop.f32.mrf.mxu0
    %1226 = vmatprep.mubr.f32.mxu0 0.0
    %1227 = vmatmul.mubr.f32.gmra.mxu0 %v1094
    %v1228 = vpop.f32.mrf.mxu0
    %v1229 = vadd.f32 %v1005, %v1228
    %v1230 = vpop.f32.mrf.mxu0
    %1231 = vmatprep.mubr.f32.mxu0 0.0
    %1232 = vmatmul.mubr.f32.gmra.mxu0 %v1096
    %v1233 = vpop.f32.mrf.mxu0
    %v1234 = vadd.f32 %v1005, %v1233
    %v1235 = vpop.f32.mrf.mxu0
    %1236 = vmatprep.mubr.f32.mxu0 0.0
    %1237 = vmatmul.mubr.f32.gmra.mxu0 %v1098
    %v1238 = vpop.f32.mrf.mxu0
    %v1239 = vadd.f32 %v1005, %v1238
    %v1240 = vpop.f32.mrf.mxu0
    %1241 = vmatprep.mubr.f32.mxu0 0.0
    %1242 = vmatmul.mubr.f32.gmra.mxu0 %v1100
    %v1243 = vpop.f32.mrf.mxu0
    %v1244 = vadd.f32 %v1005, %v1243
    %v1245 = vpop.f32.mrf.mxu0
    %1246 = vdwg.mxu0
    %v1247 = vmax.f32 %v1169, 0.0
    %v1248 = vmax.f32 %v1174, 0.0
    %v1249 = vmax.f32 %v1179, 0.0
    %v1250 = vmax.f32 %v1184, 0.0
    %v1251 = vmax.f32 %v1189, 0.0
    %v1252 = vmax.f32 %v1194, 0.0
    %v1253 = vmax.f32 %v1199, 0.0
    %v1254 = vmax.f32 %v1204, 0.0
    %v1255 = vmax.f32 %v1209, 0.0
    %v1256 = vmax.f32 %v1214, 0.0
    %v1257 = vmax.f32 %v1219, 0.0
    %v1258 = vmax.f32 %v1224, 0.0
    %v1259 = vmax.f32 %v1229, 0.0
    %v1260 = vmax.f32 %v1234, 0.0
    %v1261 = vmax.f32 %v1239, 0.0
    %v1262 = vmax.f32 %v1244, 0.0
    %vm1263 = vcmp.ne.f32.partialorder %v1169, %v1169
    %vm1264 = vcmp.ne.f32.partialorder %v1174, %v1174
    %vm1265 = vcmp.ne.f32.partialorder %v1179, %v1179
    %vm1266 = vcmp.ne.f32.partialorder %v1184, %v1184
    %vm1267 = vcmp.ne.f32.partialorder %v1189, %v1189
    %vm1268 = vcmp.ne.f32.partialorder %v1194, %v1194
    %vm1269 = vcmp.ne.f32.partialorder %v1199, %v1199
    %vm1270 = vcmp.ne.f32.partialorder %v1204, %v1204
    %vm1271 = vcmp.ne.f32.partialorder %v1209, %v1209
    %vm1272 = vcmp.ne.f32.partialorder %v1214, %v1214
    %vm1273 = vcmp.ne.f32.partialorder %v1219, %v1219
    %vm1274 = vcmp.ne.f32.partialorder %v1224, %v1224
    %vm1275 = vcmp.ne.f32.partialorder %v1229, %v1229
    %vm1276 = vcmp.ne.f32.partialorder %v1234, %v1234
    %vm1277 = vcmp.ne.f32.partialorder %v1239, %v1239
    %vm1278 = vcmp.ne.f32.partialorder %v1244, %v1244
    %v1279 = vadd.f32 %v1169, 0.0
    %v1280 = vadd.f32 %v1174, 0.0
    %v1281 = vadd.f32 %v1179, 0.0
    %v1282 = vadd.f32 %v1184, 0.0
    %v1283 = vadd.f32 %v1189, 0.0
    %v1284 = vadd.f32 %v1194, 0.0
    %v1285 = vadd.f32 %v1199, 0.0
    %v1286 = vadd.f32 %v1204, 0.0
    %v1287 = vadd.f32 %v1209, 0.0
    %v1288 = vadd.f32 %v1214, 0.0
    %v1289 = vadd.f32 %v1219, 0.0
    %v1290 = vadd.f32 %v1224, 0.0
    %v1291 = vadd.f32 %v1229, 0.0
    %v1292 = vadd.f32 %v1234, 0.0
    %v1293 = vadd.f32 %v1239, 0.0
    %v1294 = vadd.f32 %v1244, 0.0
    %v1295 = vand.u32 2147483647, %v1169
    %v1296 = vand.u32 2147483647, %v1174
    %v1297 = vand.u32 2147483647, %v1179
    %v1298 = vand.u32 2147483647, %v1184
    %v1299 = vand.u32 2147483647, %v1189
    %v1300 = vand.u32 2147483647, %v1194
    %v1301 = vand.u32 2147483647, %v1199
    %v1302 = vand.u32 2147483647, %v1204
    %v1303 = vand.u32 2147483647, %v1209
    %v1304 = vand.u32 2147483647, %v1214
    %v1305 = vand.u32 2147483647, %v1219
    %v1306 = vand.u32 2147483647, %v1224
    %v1307 = vand.u32 2147483647, %v1229
    %v1308 = vand.u32 2147483647, %v1234
    %v1309 = vand.u32 2147483647, %v1239
    %v1310 = vand.u32 2147483647, %v1244
    %v1311 = vsub.f32 0.0, %v1295
    %v1312 = vsub.f32 0.0, %v1296
    %v1313 = vsub.f32 0.0, %v1297
    %v1314 = vsub.f32 0.0, %v1298
    %v1315 = vsub.f32 0.0, %v1299
    %v1316 = vsub.f32 0.0, %v1300
    %v1317 = vsub.f32 0.0, %v1301
    %v1318 = vsub.f32 0.0, %v1302
    %v1319 = vsub.f32 0.0, %v1303
    %v1320 = vsub.f32 0.0, %v1304
    %v1321 = vsub.f32 0.0, %v1305
    %v1322 = vsub.f32 0.0, %v1306
    %v1323 = vsub.f32 0.0, %v1307
    %v1324 = vsub.f32 0.0, %v1308
    %v1325 = vsub.f32 0.0, %v1309
    %v1326 = vsub.f32 0.0, %v1310
    %v1327 = vmul.f32 %v1311, 1.442695
    %v1328 = vpow.pop %v1327
    %v1329 = vmul.f32 %v1312, 1.442695
    %v1330 = vpow.pop %v1329
    %v1331 = vmul.f32 %v1313, 1.442695
    %v1332 = vpow.pop %v1331
    %v1333 = vmul.f32 %v1314, 1.442695
    %v1334 = vpow.pop %v1333
    %v1335 = vmul.f32 %v1315, 1.442695
    %v1336 = vpow.pop %v1335
    %v1337 = vmul.f32 %v1316, 1.442695
    %v1338 = vpow.pop %v1337
    %v1339 = vmul.f32 %v1317, 1.442695
    %v1340 = vpow.pop %v1339
    %v1341 = vmul.f32 %v1318, 1.442695
    %v1342 = vpow.pop %v1341
    %v1343 = vmul.f32 %v1319, 1.442695
    %v1344 = vpow.pop %v1343
    %v1345 = vmul.f32 %v1320, 1.442695
    %v1346 = vpow.pop %v1345
    %v1347 = vmul.f32 %v1321, 1.442695
    %v1348 = vpow.pop %v1347
    %v1349 = vmul.f32 %v1322, 1.442695
    %v1350 = vpow.pop %v1349
    %v1351 = vmul.f32 %v1323, 1.442695
    %v1352 = vpow.pop %v1351
    %v1353 = vmul.f32 %v1324, 1.442695
    %v1354 = vpow.pop %v1353
    %v1355 = vmul.f32 %v1325, 1.442695
    %v1356 = vpow.pop %v1355
    %v1357 = vmul.f32 %v1326, 1.442695
    %v1358 = vpow.pop %v1357
    %v1359 = vadd.f32 %v1328, 1.0
    %v1360 = vlog2.pop %v1359
    %v1361 = vmul.f32 %v1360, 0.6931472
    %v1362 = vmul.f32 -0.5, %v1328
    %v1363 = vadd.f32 %v1362, 1.0
    %v1364 = vmul.f32 %v1363, %v1328
    %v1365 = vand.u32 2147483647, %v1328
    %vm1366 = vcmp.lt.f32.partialorder %v1365, 0.0004427343
    %v1367 = vsel %vm1366, %v1364, %v1361
    %v1368 = vadd.f32 %v1330, 1.0
    %v1369 = vlog2.pop %v1368
    %v1370 = vmul.f32 %v1369, 0.6931472
    %v1371 = vmul.f32 -0.5, %v1330
    %v1372 = vadd.f32 %v1371, 1.0
    %v1373 = vmul.f32 %v1372, %v1330
    %v1374 = vand.u32 2147483647, %v1330
    %vm1375 = vcmp.lt.f32.partialorder %v1374, 0.0004427343
    %v1376 = vsel %vm1375, %v1373, %v1370
    %v1377 = vadd.f32 %v1332, 1.0
    %v1378 = vlog2.pop %v1377
    %v1379 = vmul.f32 %v1378, 0.6931472
    %v1380 = vmul.f32 -0.5, %v1332
    %v1381 = vadd.f32 %v1380, 1.0
    %v1382 = vmul.f32 %v1381, %v1332
    %v1383 = vand.u32 2147483647, %v1332
    %vm1384 = vcmp.lt.f32.partialorder %v1383, 0.0004427343
    %v1385 = vsel %vm1384, %v1382, %v1379
    %v1386 = vadd.f32 %v1334, 1.0
    %v1387 = vlog2.pop %v1386
    %v1388 = vmul.f32 %v1387, 0.6931472
    %v1389 = vmul.f32 -0.5, %v1334
    %v1390 = vadd.f32 %v1389, 1.0
    %v1391 = vmul.f32 %v1390, %v1334
    %v1392 = vand.u32 2147483647, %v1334
    %vm1393 = vcmp.lt.f32.partialorder %v1392, 0.0004427343
    %v1394 = vsel %vm1393, %v1391, %v1388
    %v1395 = vadd.f32 %v1336, 1.0
    %v1396 = vlog2.pop %v1395
    %v1397 = vmul.f32 %v1396, 0.6931472
    %v1398 = vmul.f32 -0.5, %v1336
    %v1399 = vadd.f32 %v1398, 1.0
    %v1400 = vmul.f32 %v1399, %v1336
    %v1401 = vand.u32 2147483647, %v1336
    %vm1402 = vcmp.lt.f32.partialorder %v1401, 0.0004427343
    %v1403 = vsel %vm1402, %v1400, %v1397
    %v1404 = vadd.f32 %v1338, 1.0
    %v1405 = vlog2.pop %v1404
    %v1406 = vmul.f32 %v1405, 0.6931472
    %v1407 = vmul.f32 -0.5, %v1338
    %v1408 = vadd.f32 %v1407, 1.0
    %v1409 = vmul.f32 %v1408, %v1338
    %v1410 = vand.u32 2147483647, %v1338
    %vm1411 = vcmp.lt.f32.partialorder %v1410, 0.0004427343
    %v1412 = vsel %vm1411, %v1409, %v1406
    %v1413 = vadd.f32 %v1340, 1.0
    %v1414 = vlog2.pop %v1413
    %v1415 = vmul.f32 %v1414, 0.6931472
    %v1416 = vmul.f32 -0.5, %v1340
    %v1417 = vadd.f32 %v1416, 1.0
    %v1418 = vmul.f32 %v1417, %v1340
    %v1419 = vand.u32 2147483647, %v1340
    %vm1420 = vcmp.lt.f32.partialorder %v1419, 0.0004427343
    %v1421 = vsel %vm1420, %v1418, %v1415
    %v1422 = vadd.f32 %v1342, 1.0
    %v1423 = vlog2.pop %v1422
    %v1424 = vmul.f32 %v1423, 0.6931472
    %v1425 = vmul.f32 -0.5, %v1342
    %v1426 = vadd.f32 %v1425, 1.0
    %v1427 = vmul.f32 %v1426, %v1342
    %v1428 = vand.u32 2147483647, %v1342
    %vm1429 = vcmp.lt.f32.partialorder %v1428, 0.0004427343
    %v1430 = vsel %vm1429, %v1427, %v1424
    %v1431 = vadd.f32 %v1344, 1.0
    %v1432 = vlog2.pop %v1431
    %v1433 = vmul.f32 %v1432, 0.6931472
    %v1434 = vmul.f32 -0.5, %v1344
    %v1435 = vadd.f32 %v1434, 1.0
    %v1436 = vmul.f32 %v1435, %v1344
    %v1437 = vand.u32 2147483647, %v1344
    %vm1438 = vcmp.lt.f32.partialorder %v1437, 0.0004427343
    %v1439 = vsel %vm1438, %v1436, %v1433
    %v1440 = vadd.f32 %v1346, 1.0
    %v1441 = vlog2.pop %v1440
    %v1442 = vmul.f32 %v1441, 0.6931472
    %v1443 = vmul.f32 -0.5, %v1346
    %v1444 = vadd.f32 %v1443, 1.0
    %v1445 = vmul.f32 %v1444, %v1346
    %v1446 = vand.u32 2147483647, %v1346
    %vm1447 = vcmp.lt.f32.partialorder %v1446, 0.0004427343
    %v1448 = vsel %vm1447, %v1445, %v1442
    %v1449 = vadd.f32 %v1348, 1.0
    %v1450 = vlog2.pop %v1449
    %v1451 = vmul.f32 %v1450, 0.6931472
    %v1452 = vmul.f32 -0.5, %v1348
    %v1453 = vadd.f32 %v1452, 1.0
    %v1454 = vmul.f32 %v1453, %v1348
    %v1455 = vand.u32 2147483647, %v1348
    %vm1456 = vcmp.lt.f32.partialorder %v1455, 0.0004427343
    %v1457 = vsel %vm1456, %v1454, %v1451
    %v1458 = vadd.f32 %v1350, 1.0
    %v1459 = vlog2.pop %v1458
    %v1460 = vmul.f32 %v1459, 0.6931472
    %v1461 = vmul.f32 -0.5, %v1350
    %v1462 = vadd.f32 %v1461, 1.0
    %v1463 = vmul.f32 %v1462, %v1350
    %v1464 = vand.u32 2147483647, %v1350
    %vm1465 = vcmp.lt.f32.partialorder %v1464, 0.0004427343
    %v1466 = vsel %vm1465, %v1463, %v1460
    %v1467 = vadd.f32 %v1352, 1.0
    %v1468 = vlog2.pop %v1467
    %v1469 = vmul.f32 %v1468, 0.6931472
    %v1470 = vmul.f32 -0.5, %v1352
    %v1471 = vadd.f32 %v1470, 1.0
    %v1472 = vmul.f32 %v1471, %v1352
    %v1473 = vand.u32 2147483647, %v1352
    %vm1474 = vcmp.lt.f32.partialorder %v1473, 0.0004427343
    %v1475 = vsel %vm1474, %v1472, %v1469
    %v1476 = vadd.f32 %v1354, 1.0
    %v1477 = vlog2.pop %v1476
    %v1478 = vmul.f32 %v1477, 0.6931472
    %v1479 = vmul.f32 -0.5, %v1354
    %v1480 = vadd.f32 %v1479, 1.0
    %v1481 = vmul.f32 %v1480, %v1354
    %v1482 = vand.u32 2147483647, %v1354
    %vm1483 = vcmp.lt.f32.partialorder %v1482, 0.0004427343
    %v1484 = vsel %vm1483, %v1481, %v1478
    %v1485 = vadd.f32 %v1356, 1.0
    %v1486 = vlog2.pop %v1485
    %v1487 = vmul.f32 %v1486, 0.6931472
    %v1488 = vmul.f32 -0.5, %v1356
    %v1489 = vadd.f32 %v1488, 1.0
    %v1490 = vmul.f32 %v1489, %v1356
    %v1491 = vand.u32 2147483647, %v1356
    %vm1492 = vcmp.lt.f32.partialorder %v1491, 0.0004427343
    %v1493 = vsel %vm1492, %v1490, %v1487
    %v1494 = vadd.f32 %v1358, 1.0
    %v1495 = vlog2.pop %v1494
    %v1496 = vmul.f32 %v1495, 0.6931472
    %v1497 = vmul.f32 -0.5, %v1358
    %v1498 = vadd.f32 %v1497, 1.0
    %v1499 = vmul.f32 %v1498, %v1358
    %v1500 = vand.u32 2147483647, %v1358
    %vm1501 = vcmp.lt.f32.partialorder %v1500, 0.0004427343
    %v1502 = vsel %vm1501, %v1499, %v1496
    %v1503 = vadd.f32 %v1247, %v1367
    %v1504 = vadd.f32 %v1248, %v1376
    %v1505 = vadd.f32 %v1249, %v1385
    %v1506 = vadd.f32 %v1250, %v1394
    %v1507 = vadd.f32 %v1251, %v1403
    %v1508 = vadd.f32 %v1252, %v1412
    %v1509 = vadd.f32 %v1253, %v1421
    %v1510 = vadd.f32 %v1254, %v1430
    %v1511 = vadd.f32 %v1255, %v1439
    %v1512 = vadd.f32 %v1256, %v1448
    %v1513 = vadd.f32 %v1257, %v1457
    %v1514 = vadd.f32 %v1258, %v1466
    %v1515 = vadd.f32 %v1259, %v1475
    %v1516 = vadd.f32 %v1260, %v1484
    %v1517 = vadd.f32 %v1261, %v1493
    %v1518 = vadd.f32 %v1262, %v1502
    %v1519 = vsel %vm1263, %v1279, %v1503
    %v1520 = vsel %vm1264, %v1280, %v1504
    %v1521 = vsel %vm1265, %v1281, %v1505
    %v1522 = vsel %vm1266, %v1282, %v1506
    %v1523 = vsel %vm1267, %v1283, %v1507
    %v1524 = vsel %vm1268, %v1284, %v1508
    %v1525 = vsel %vm1269, %v1285, %v1509
    %v1526 = vsel %vm1270, %v1286, %v1510
    %v1527 = vsel %vm1271, %v1287, %v1511
    %v1528 = vsel %vm1272, %v1288, %v1512
    %v1529 = vsel %vm1273, %v1289, %v1513
    %v1530 = vsel %vm1274, %v1290, %v1514
    %v1531 = vsel %vm1275, %v1291, %v1515
    %v1532 = vsel %vm1276, %v1292, %v1516
    %v1533 = vsel %vm1277, %v1293, %v1517
    %v1534 = vsel %vm1278, %v1294, %v1518
    %1535 = vst.msk [vmem:[#allocation2] sm:$0xff] %vm53, %v970
    %1536 = vst.msk [vmem:[#allocation2 + $0x8] sm:$0xff] %vm53, %v971
    %1537 = vst.msk [vmem:[#allocation2 + $0x10] sm:$0xff] %vm53, %v972
    %1538 = vst.msk [vmem:[#allocation2 + $0x18] sm:$0xff] %vm53, %v973
    %1539 = vst.msk [vmem:[#allocation2 + $0x20] sm:$0xff] %vm53, %v974
    %1540 = vst.msk [vmem:[#allocation2 + $0x28] sm:$0xff] %vm53, %v975
    %1541 = vst.msk [vmem:[#allocation2 + $0x30] sm:$0xff] %vm53, %v976
    %1542 = vst.msk [vmem:[#allocation2 + $0x38] sm:$0xff] %vm53, %v977
    %1543 = vst.msk [vmem:[#allocation2 + $0x40] sm:$0xff] %vm53, %v978
    %1544 = vst.msk [vmem:[#allocation2 + $0x48] sm:$0xff] %vm53, %v979
    %1545 = vst.msk [vmem:[#allocation2 + $0x50] sm:$0xff] %vm53, %v980
    %1546 = vst.msk [vmem:[#allocation2 + $0x58] sm:$0xff] %vm53, %v981
    %1547 = vst.msk [vmem:[#allocation2 + $0x60] sm:$0xff] %vm53, %v982
    %1548 = vst.msk [vmem:[#allocation2 + $0x68] sm:$0xff] %vm53, %v983
    %1549 = vst.msk [vmem:[#allocation2 + $0x70] sm:$0xff] %vm53, %v984
    %1550 = vst.msk [vmem:[#allocation2 + $0x78] sm:$0xff] %vm53, %v985
    %1567 = vrot.lane.b32.xlu0 %v1519, 32
    %v1568 = vpop.permute.xlu0 %1567
    %1569 = vrot.lane.b32.xlu0 %v1520, 32
    %v1570 = vpop.permute.xlu0 %1569
    %1571 = vrot.lane.b32.xlu0 %v1521, 32
    %v1572 = vpop.permute.xlu0 %1571
    %1573 = vrot.lane.b32.xlu0 %v1522, 32
    %v1574 = vpop.permute.xlu0 %1573
    %1575 = vrot.lane.b32.xlu0 %v1523, 32
    %v1576 = vpop.permute.xlu0 %1575
    %1577 = vrot.lane.b32.xlu0 %v1524, 32
    %v1578 = vpop.permute.xlu0 %1577
    %1579 = vrot.lane.b32.xlu0 %v1525, 32
    %v1580 = vpop.permute.xlu0 %1579
    %1581 = vrot.lane.b32.xlu0 %v1526, 32
    %v1582 = vpop.permute.xlu0 %1581
    %1583 = vrot.lane.b32.xlu0 %v1527, 32
    %v1584 = vpop.permute.xlu0 %1583
    %1585 = vrot.lane.b32.xlu0 %v1528, 32
    %v1586 = vpop.permute.xlu0 %1585
    %1587 = vrot.lane.b32.xlu0 %v1529, 32
    %v1588 = vpop.permute.xlu0 %1587
    %1589 = vrot.lane.b32.xlu0 %v1530, 32
    %v1590 = vpop.permute.xlu0 %1589
    %1591 = vrot.lane.b32.xlu0 %v1531, 32
    %v1592 = vpop.permute.xlu0 %1591
    %1593 = vrot.lane.b32.xlu0 %v1532, 32
    %v1594 = vpop.permute.xlu0 %1593
    %1595 = vrot.lane.b32.xlu0 %v1533, 32
    %v1596 = vpop.permute.xlu0 %1595
    %1597 = vrot.lane.b32.xlu0 %v1534, 32
    %v1598 = vpop.permute.xlu0 %1597
    %vm1615 = vcmask 523520
    %1616 = vst.msk [vmem:[#allocation2] sm:$0xff] %vm1615, %v1568
    %1617 = vst.msk [vmem:[#allocation2 + $0x8] sm:$0xff] %vm1615, %v1570
    %1618 = vst.msk [vmem:[#allocation2 + $0x10] sm:$0xff] %vm1615, %v1572
    %1619 = vst.msk [vmem:[#allocation2 + $0x18] sm:$0xff] %vm1615, %v1574
    %1620 = vst.msk [vmem:[#allocation2 + $0x20] sm:$0xff] %vm1615, %v1576
    %1621 = vst.msk [vmem:[#allocation2 + $0x28] sm:$0xff] %vm1615, %v1578
    %1622 = vst.msk [vmem:[#allocation2 + $0x30] sm:$0xff] %vm1615, %v1580
    %1623 = vst.msk [vmem:[#allocation2 + $0x38] sm:$0xff] %vm1615, %v1582
    %1624 = vst.msk [vmem:[#allocation2 + $0x40] sm:$0xff] %vm1615, %v1584
    %1625 = vst.msk [vmem:[#allocation2 + $0x48] sm:$0xff] %vm1615, %v1586
    %1626 = vst.msk [vmem:[#allocation2 + $0x50] sm:$0xff] %vm1615, %v1588
    %1627 = vst.msk [vmem:[#allocation2 + $0x58] sm:$0xff] %vm1615, %v1590
    %1628 = vst.msk [vmem:[#allocation2 + $0x60] sm:$0xff] %vm1615, %v1592
    %1629 = vst.msk [vmem:[#allocation2 + $0x68] sm:$0xff] %vm1615, %v1594
    %1630 = vst.msk [vmem:[#allocation2 + $0x70] sm:$0xff] %vm1615, %v1596
    %1631 = vst.msk [vmem:[#allocation2 + $0x78] sm:$0xff] %vm1615, %v1598
    %vm1632 = vcmask 1048064
    %1633 = vst.msk [vmem:[#allocation2] sm:$0xff] %vm1632, 0.0
    %1634 = vst.msk [vmem:[#allocation2 + $0x8] sm:$0xff] %vm1632, 0.0
    %1635 = vst.msk [vmem:[#allocation2 + $0x10] sm:$0xff] %vm1632, 0.0
    %1636 = vst.msk [vmem:[#allocation2 + $0x18] sm:$0xff] %vm1632, 0.0
    %1637 = vst.msk [vmem:[#allocation2 + $0x20] sm:$0xff] %vm1632, 0.0
    %1638 = vst.msk [vmem:[#allocation2 + $0x28] sm:$0xff] %vm1632, 0.0
    %1639 = vst.msk [vmem:[#allocation2 + $0x30] sm:$0xff] %vm1632, 0.0
    %1640 = vst.msk [vmem:[#allocation2 + $0x38] sm:$0xff] %vm1632, 0.0
    %1641 = vst.msk [vmem:[#allocation2 + $0x40] sm:$0xff] %vm1632, 0.0
    %1642 = vst.msk [vmem:[#allocation2 + $0x48] sm:$0xff] %vm1632, 0.0
    %1643 = vst.msk [vmem:[#allocation2 + $0x50] sm:$0xff] %vm1632, 0.0
    %1644 = vst.msk [vmem:[#allocation2 + $0x58] sm:$0xff] %vm1632, 0.0
    %1645 = vst.msk [vmem:[#allocation2 + $0x60] sm:$0xff] %vm1632, 0.0
    %1646 = vst.msk [vmem:[#allocation2 + $0x68] sm:$0xff] %vm1632, 0.0
    %1647 = vst.msk [vmem:[#allocation2 + $0x70] sm:$0xff] %vm1632, 0.0
    %1648 = vst.msk [vmem:[#allocation2 + $0x78] sm:$0xff] %vm1632, 0.0
    // Predicated region
    $region26: #{tpu_custom_call.1} parent=1 // pred_check
      _
    $region27: #{tpu_custom_call.1} parent=1 // pred_check_branch
      %1650 = sbr.rel (0) target = $region29
    $region28: #{tpu_custom_call.1} parent=1 // pred_region
      %s1652 = ssub.s32 2048, 2048
      %1653 = vsyncadd [#allocation3], %s1652
      %s1654 = sshll.u32 [#allocation2], 4
      %s1655 = int_to_ptr.vmem [resolvable:$true] %s1654
      %1660 = dma.vmem_to_hbm [thread:$0]  %s1655, 2048, %s6, [#allocation3], 128, 128, 8
    $region29: #{tpu_custom_call.1} parent=1 // pred_fallthru
      _
    // Predicated region
    $region30: #{tpu_custom_call.1} parent=1 // pred_check
      _
    $region31: #{tpu_custom_call.1} parent=1 // pred_check_branch
      %1662 = sbr.rel (0) target = $region33
    $region32: #{tpu_custom_call.1} parent=1 // pred_region
      %1663 = dma.done [#allocation3], 2048
    $region33: #{tpu_custom_call.1} parent=1 // pred_fallthru
      _
    %1664 = vsyncpa [#allocation3], 1

</llo_original>
